<compile_context>
chip_gen: v5e
topology: v5e:2x2
jax: 0.10.0
libtpu: 0.0.40
codegen_flags: <defaults>
</compile_context>

<pallas_src>
import functools

import jax
import jax.numpy as jnp
from jax.experimental import pallas as pl
from jax.experimental.pallas import tpu as pltpu


def _round_up(x, m):
    return ((x + m - 1) // m) * m


_VMEM_LIMIT = 40 * 1024 * 1024   # generation-safe scoped VMEM request


# ---------------------------------------------------------------------------
# Pallas kernel 1: plain tiled matmul (layer 1: ConvT on a 1x1 input == z @ W)
# ---------------------------------------------------------------------------
def _matmul_kernel(a_ref, w_ref, o_ref):
    o_ref[...] = jnp.dot(a_ref[...], w_ref[...],
                         preferred_element_type=jnp.float32).astype(o_ref.dtype)


def small_matmul(a, w, *, tn=2048, out_dtype=jnp.bfloat16):
    """a: (M, K) bf16, w: (K, Ncols) bf16 -> (M, Ncols) out_dtype.  Ncols % tn == 0."""
    M, K = a.shape
    K2, ncols = w.shape
    assert K == K2 and ncols % tn == 0 and tn % 128 == 0
    return pl.pallas_call(
        _matmul_kernel,
        out_shape=jax.ShapeDtypeStruct((M, ncols), out_dtype),
        grid_spec=pltpu.PrefetchScalarGridSpec(
            num_scalar_prefetch=0,
            grid=(ncols // tn,),                  # >= 2 steps so both v7x cores work
            in_specs=[pl.BlockSpec((M, K), lambda j: (0, 0)),
                      pl.BlockSpec((K, tn), lambda j: (0, j))],
            out_specs=pl.BlockSpec((M, tn), lambda j: (0, j)),
        ),
        compiler_params=pltpu.CompilerParams(
            dimension_semantics=("parallel",),
            vmem_limit_bytes=_VMEM_LIMIT),
    )(a, w)


# ---------------------------------------------------------------------------
# Pallas kernel 2: one output phase of ConvTranspose2d(k=4, s=2, p=1)
#
# For phase (ry, rx) in {0,1}^2 and tap (dy, dx) in {0,1}^2:
#   y[n, 2*my+ry, 2*mx+rx, co] =
#     sum_{dy,dx,ci} x_pad[n, my+ry+dy, mx+rx+dx, ci] * W[ci, co, 3-ry-2dy, 3-rx-2dx]
# With x_pad flattened row-major over the padded (Hp, Wp) grid, the tap read is
# a contiguous row-slice at static offset (ry+dy)*Wp + (rx+dx); output rows are
# my*Wp+mx (rows with mx >= W are throwaway and sliced off in glue).
# ---------------------------------------------------------------------------
def _subpix_phase_kernel(x_ref, w_ref, o_ref, *, ry, rx, wp):
    """x_ref: (x_rows, cin_pad) bf16   flattened, spatially zero-padded activation
       w_ref: (4, cin_pad, cout_pad)   the 4 (dy, dx) weight taps of this phase
       o_ref: (rows, cout_pad) bf16    rows = H*wp (lane-dense, raw conv output)"""
    rows = o_ref.shape[0]
    acc = None
    for t, (dy, dx) in enumerate(((0, 0), (0, 1), (1, 0), (1, 1))):
        off = (ry + dy) * wp + (rx + dx)                 # static Python int
        a = x_ref[pl.ds(off, rows), :]
        d = jnp.dot(a, w_ref[t], preferred_element_type=jnp.float32)
        acc = d if acc is None else acc + d
    o_ref[...] = acc.astype(o_ref.dtype)


def subpixel_conv_t(x_flat, w_packed, *, wp, rows):
    """x_flat: (N, x_rows, cin_pad) bf16, w_packed: (4, 4, cin_pad, cout_pad) bf16
       -> (4, N, rows, cout_pad) bf16 raw per-phase conv output (no BN/act)."""
    N, x_rows, cin_p = x_flat.shape
    cout_p = w_packed.shape[-1]
    outs = []
    for p, (ry, rx) in enumerate(((0, 0), (0, 1), (1, 0), (1, 1))):
        kern = functools.partial(_subpix_phase_kernel, ry=ry, rx=rx, wp=wp)
        o = pl.pallas_call(
            kern,
            out_shape=jax.ShapeDtypeStruct((N, rows, cout_p), jnp.bfloat16),
            grid_spec=pltpu.PrefetchScalarGridSpec(
                num_scalar_prefetch=0,
                grid=(N,),
                in_specs=[
                    pl.BlockSpec((None, x_rows, cin_p), lambda n: (n, 0, 0)),
                    pl.BlockSpec((4, cin_p, cout_p), lambda n: (0, 0, 0)),
                ],
                out_specs=pl.BlockSpec((None, rows, cout_p), lambda n: (n, 0, 0)),
            ),
            compiler_params=pltpu.CompilerParams(
                dimension_semantics=("parallel",),
                vmem_limit_bytes=_VMEM_LIMIT),
        )(x_flat, w_packed[p])
        outs.append(o)
    return jnp.stack(outs, axis=0)


# ---------------------------------------------------------------------------
# XLA glue (fused elementwise / layout passes between Pallas calls)
# ---------------------------------------------------------------------------
def _flatten_pad_input(x_nhwc, wp, x_rows):
    """(N, H, W, Cpad) -> (N, x_rows, Cpad): zero-pad spatially by 1, flatten rows."""
    N, H, W, C = x_nhwc.shape
    assert wp == W + 2
    xp = jnp.pad(x_nhwc, ((0, 0), (1, 1), (1, 1), (0, 0)))
    xf = xp.reshape(N, (H + 2) * wp, C)
    return jnp.pad(xf, ((0, 0), (0, x_rows - (H + 2) * wp), (0, 0)))


def _valid_phase_output(y, H, W, wp):
    """(4, N, rows, Cp) -> (4, N, H, W, Cp): drop the (wp - W) throwaway columns."""
    N, cp = y.shape[1], y.shape[-1]
    return y[:, :, :H * wp, :].reshape(4, N, H, wp, cp)[:, :, :, :W, :]


def _depth_to_space(yv):
    """(4, N, H, W, C) phase-major (ry, rx) -> (N, 2H, 2W, C)."""
    _, N, H, W, C = yv.shape
    y = yv.reshape(2, 2, N, H, W, C)
    y = jnp.transpose(y, (2, 3, 0, 4, 1, 5))
    return y.reshape(N, 2 * H, 2 * W, C)


def _bn_relu(y, gamma, beta, eps=1e-5):
    """BatchNorm (training-mode batch statistics, biased var) + ReLU, per channel.
    Padded channels have gamma = beta = 0 and zero input, so they stay zero."""
    xf = y.astype(jnp.float32)
    axes = tuple(range(xf.ndim - 1))
    count = 1
    for a in axes:
        count *= xf.shape[a]
    s1 = jnp.sum(xf, axis=axes)
    s2 = jnp.sum(xf * xf, axis=axes)
    mean = s1 / count
    var = jnp.maximum(s2 / count - mean * mean, 0.0)
    scale = gamma * jax.lax.rsqrt(var + eps)
    bias = beta - mean * scale
    return jnp.maximum(xf * scale + bias, 0.0).astype(jnp.bfloat16)


# ---------------------------------------------------------------------------
# Generator matching the PyTorch module
# ---------------------------------------------------------------------------
LAYER_CFG = [
    # (Cin, Cout, k, stride, pad)
    (100, 512, 4, 1, 0),   # 1x1   -> 4x4
    (512, 256, 4, 2, 1),   # 4x4   -> 8x8
    (256, 128, 4, 2, 1),   # 8x8   -> 16x16
    (128,  64, 4, 2, 1),   # 16x16 -> 32x32
    ( 64,  32, 4, 2, 1),   # 32x32 -> 64x64
    ( 32,   3, 4, 2, 1),   # 64x64 -> 128x128, then Tanh
]


def init_params(key):
    params = []
    for i, (cin, cout, k, _s, _p) in enumerate(LAYER_CFG):
        key, wk = jax.random.split(key)
        w = 0.02 * jax.random.normal(wk, (cin, cout, k, k), jnp.float32)
        if i < len(LAYER_CFG) - 1:
            gamma = jnp.ones((cout,), jnp.float32)    # PyTorch BN affine init
            beta = jnp.zeros((cout,), jnp.float32)
        else:
            gamma = beta = None
        params.append((w, gamma, beta))
    return params


def _pack_subpixel_weights(w_pt, cin_pad, cout_pad):
    """(Cin, Cout, 4, 4) PyTorch ConvT weight -> (4 phases, 4 taps, cin_pad, cout_pad) bf16."""
    cin, cout, k, _ = w_pt.shape
    assert k == 4
    phases = []
    for ry in range(2):
        for rx in range(2):
            taps = []
            for dy in range(2):
                for dx in range(2):
                    tap = w_pt[:, :, (3 - ry) - 2 * dy, (3 - rx) - 2 * dx]
                    taps.append(jnp.pad(tap, ((0, cin_pad - cin),
                                              (0, cout_pad - cout))))
            phases.append(jnp.stack(taps, axis=0))
    return jnp.stack(phases, axis=0).astype(jnp.bfloat16)


def prepare_params(params):
    """One-time weight packing (hoisted out of the forward pass)."""
    prepped = []
    cin0, cout0 = LAYER_CFG[0][0], LAYER_CFG[0][1]
    w0, g0, b0 = params[0]
    k_pad = _round_up(cin0, 128)
    wmat = jnp.transpose(w0, (0, 2, 3, 1)).reshape(cin0, 16 * cout0)   # (ci, (ky,kx,co))
    wmat = jnp.pad(wmat, ((0, k_pad - cin0), (0, 0))).astype(jnp.bfloat16)
    prepped.append((wmat, g0.astype(jnp.float32), b0.astype(jnp.float32)))
    for li in range(1, len(LAYER_CFG)):
        cin, cout = LAYER_CFG[li][0], LAYER_CFG[li][1]
        w, gamma, beta = params[li]
        cin_pad, cout_pad = _round_up(cin, 128), _round_up(cout, 128)
        wpk = _pack_subpixel_weights(w, cin_pad, cout_pad)
        if gamma is not None:
            gp = jnp.pad(gamma, (0, cout_pad - cout)).astype(jnp.float32)
            bp = jnp.pad(beta, (0, cout_pad - cout)).astype(jnp.float32)
        else:
            gp = bp = None
        prepped.append((wpk, gp, bp))
    return prepped


def generator_forward(z_nchw, prepped):
    """z: (N, 100, 1, 1) -> (N, 3, 128, 128) f32, NCHW in/out like PyTorch."""
    N = z_nchw.shape[0]
    cdt = jnp.bfloat16

    # ---- layer 1: ConvT(100->512, k4, s1, p0) on a 1x1 input == plain matmul ----
    wmat, g0, b0 = prepped[0]
    cin0, cout0 = LAYER_CFG[0][0], LAYER_CFG[0][1]
    z = z_nchw.reshape(N, cin0)
    z = jnp.pad(z, ((0, 0), (0, wmat.shape[0] - cin0))).astype(cdt)
    y = small_matmul(z, wmat, tn=2048)                    # (N, 16*512) bf16
    x = _bn_relu(y.reshape(N, 4, 4, cout0), g0, b0)       # (N, 4, 4, 512) bf16 NHWC
    H = W = 4

    # ---- stride-2 sub-pixel ConvTranspose layers ----
    out = None
    for li in range(1, len(LAYER_CFG)):
        cin, cout = LAYER_CFG[li][0], LAYER_CFG[li][1]
        wpk, gp, bp = prepped[li]
        cin_pad, cout_pad = wpk.shape[2], wpk.shape[3]
        wp = W + 2
        rows = _round_up(H * wp, 8)
        x_rows = _round_up(rows + 2 * wp + 2, 8)
        if x.shape[-1] != cin_pad:                        # never hit for this net
            x = jnp.pad(x, ((0, 0), (0, 0), (0, 0), (0, cin_pad - x.shape[-1])))
        xf = _flatten_pad_input(x.astype(cdt), wp, x_rows)
        y = subpixel_conv_t(xf, wpk, wp=wp, rows=rows)    # (4, N, rows, cout_pad)
        yv = _valid_phase_output(y, H, W, wp)             # (4, N, H, W, cout_pad)
        if li < len(LAYER_CFG) - 1:
            # BN(batch stats) + ReLU + depth-to-space + (next) pad: fused XLA glue.
            x = _depth_to_space(_bn_relu(yv, gp, bp))     # (N, 2H, 2W, cout_pad)
        else:
            # Final layer: Tanh in f32, only on the 3 real channels, in glue.
            o = jnp.tanh(yv[..., :cout].astype(jnp.float32))
            out = _depth_to_space(o)                      # (N, 128, 128, 3)
        H, W = 2 * H, 2 * W

    return jnp.transpose(out, (0, 3, 1, 2))               # NCHW f32


# ---------------------------------------------------------------------------
# Naive reference (pure jnp) to unit-check the sub-pixel decomposition
# ---------------------------------------------------------------------------
def _conv_transpose2d_ref(x_nhwc, w_pt, stride, pad):
    N, H, W, Cin = x_nhwc.shape
    _, Cout, k, _ = w_pt.shape
    Ho = (H - 1) * stride - 2 * pad + k
    Wo = (W - 1) * stride - 2 * pad + k
    y = jnp.zeros((N, Ho + 2 * pad, Wo + 2 * pad, Cout), jnp.float32)
    for ky in range(k):
        for kx in range(k):
            contrib = jnp.einsum("nhwc,cd->nhwd", x_nhwc, w_pt[:, :, ky, kx],
                                 precision=jax.lax.Precision.HIGHEST)
            y = y.at[:, ky:ky + stride * (H - 1) + 1:stride,
                        kx:kx + stride * (W - 1) + 1:stride, :].add(contrib)
    return y[:, pad:pad + Ho, pad:pad + Wo, :]


def _conv_t_s2_pallas_test(x_nhwc, w_pt):
    N, H, W, cin = x_nhwc.shape
    cout = w_pt.shape[1]
    cin_pad, cout_pad = _round_up(cin, 128), _round_up(cout, 128)
    wpk = _pack_subpixel_weights(w_pt, cin_pad, cout_pad)
    xp = jnp.pad(x_nhwc.astype(jnp.bfloat16),
                 ((0, 0), (0, 0), (0, 0), (0, cin_pad - cin)))
    wp = W + 2
    rows = _round_up(H * wp, 8)
    x_rows = _round_up(rows + 2 * wp + 2, 8)
    xf = _flatten_pad_input(xp, wp, x_rows)
    y = subpixel_conv_t(xf, wpk, wp=wp, rows=rows)
    yv = _valid_phase_output(y, H, W, wp)[..., :cout].astype(jnp.float32)
    return _depth_to_space(yv)


if __name__ == "__main__":
    key = jax.random.PRNGKey(0)
    pkey, zkey, tkey = jax.random.split(key, 3)

    # -- unit check: sub-pixel ConvTranspose(k=4, s=2, p=1) vs naive reference --
    k1, k2 = jax.random.split(tkey)
    xt = jax.random.normal(k1, (2, 4, 4, 32), jnp.float32)
    wt = 0.05 * jax.random.normal(k2, (32, 3, 4, 4), jnp.float32)
    got = jax.block_until_ready(jax.jit(_conv_t_s2_pallas_test)(xt, wt))
    want = _conv_transpose2d_ref(xt.astype(jnp.bfloat16).astype(jnp.float32),
                                 wt.astype(jnp.bfloat16).astype(jnp.float32), 2, 1)
    assert got.shape == want.shape == (2, 8, 8, 3)
    assert bool(jnp.allclose(got, want, rtol=2e-3, atol=2e-3)), \
        float(jnp.max(jnp.abs(got - want)))

    # -- full generator forward: (2, 100, 1, 1) -> (2, 3, 128, 128) --
    params = init_params(pkey)
    prepped = prepare_params(params)        # one-time bf16 weight packing
    z = jax.random.normal(zkey, (2, 100, 1, 1), jnp.float32)
    out = jax.jit(generator_forward)(z, prepped)
    out = jax.block_until_ready(out)
    assert out.shape == (2, 3, 128, 128), out.shape
    assert bool(jnp.all(jnp.isfinite(out)))
    assert float(jnp.max(jnp.abs(out))) <= 1.0 + 1e-6      # tanh range
    print("KERNEL_OK")
</pallas_src>

<mosaic_0001>
module attributes {stable_mosaic.version = 11 : i64} {
  func.func @_subpix_phase_kernel(%arg0: i32, %arg1: memref<1x40x128xbf16, #tpu.memory_space<vmem>>, %arg2: memref<4x128x128xbf16, #tpu.memory_space<vmem>>, %arg3: memref<1x24x128xbf16, #tpu.memory_space<vmem>>) attributes {dimension_semantics = [#tpu.dimension_semantics<parallel>], iteration_bounds = array<i64: 2>, scalar_prefetch = 0 : i64, scratch_operands = 0 : i64, tpu.core_type = #tpu.core_type<tc>, window_params = [{transform_indices = @transform_0, window_bounds = array<i64: 1, 40, 128>}, {pipeline_mode = #tpu.pipeline_mode<synchronous>, transform_indices = @transform_1, window_bounds = array<i64: 4, 128, 128>}, {transform_indices = @transform_2, window_bounds = array<i64: 1, 24, 128>}]} {
    %c0 = arith.constant 0 : index
    %c6 = arith.constant 6 : index
    %c0_0 = arith.constant 0 : index
    %0 = vector.load %arg1[%c0, %c6, %c0_0] : memref<1x40x128xbf16, #tpu.memory_space<vmem>>, vector<1x24x128xbf16>
    %1 = vector.shape_cast %0 : vector<1x24x128xbf16> to vector<24x128xbf16>
    %c0_1 = arith.constant 0 : index
    %c0_2 = arith.constant 0 : index
    %c0_3 = arith.constant 0 : index
    %2 = vector.load %arg2[%c0_1, %c0_2, %c0_3] : memref<4x128x128xbf16, #tpu.memory_space<vmem>>, vector<1x128x128xbf16>
    %3 = vector.shape_cast %2 : vector<1x128x128xbf16> to vector<128x128xbf16>
    %cst = arith.constant dense<0.000000e+00> : vector<24x128xf32>
    %4 = tpu.matmul %1, %3, %cst {dimension_numbers = #tpu.dot_dimension_numbers<[1], [0], [0], [1], [0, 0, 1, 1], [], []>} : vector<24x128xbf16>, vector<128x128xbf16>, vector<24x128xf32> -> vector<24x128xf32>
    %c0_4 = arith.constant 0 : index
    %c7 = arith.constant 7 : index
    %c0_5 = arith.constant 0 : index
    %5 = vector.load %arg1[%c0_4, %c7, %c0_5] : memref<1x40x128xbf16, #tpu.memory_space<vmem>>, vector<1x24x128xbf16>
    %6 = vector.shape_cast %5 : vector<1x24x128xbf16> to vector<24x128xbf16>
    %c1 = arith.constant 1 : index
    %c0_6 = arith.constant 0 : index
    %c0_7 = arith.constant 0 : index
    %7 = vector.load %arg2[%c1, %c0_6, %c0_7] : memref<4x128x128xbf16, #tpu.memory_space<vmem>>, vector<1x128x128xbf16>
    %8 = vector.shape_cast %7 : vector<1x128x128xbf16> to vector<128x128xbf16>
    %cst_8 = arith.constant dense<0.000000e+00> : vector<24x128xf32>
    %9 = tpu.matmul %6, %8, %cst_8 {dimension_numbers = #tpu.dot_dimension_numbers<[1], [0], [0], [1], [0, 0, 1, 1], [], []>} : vector<24x128xbf16>, vector<128x128xbf16>, vector<24x128xf32> -> vector<24x128xf32>
    %10 = arith.addf %4, %9 : vector<24x128xf32>
    %c0_9 = arith.constant 0 : index
    %c12 = arith.constant 12 : index
    %c0_10 = arith.constant 0 : index
    %11 = vector.load %arg1[%c0_9, %c12, %c0_10] : memref<1x40x128xbf16, #tpu.memory_space<vmem>>, vector<1x24x128xbf16>
    %12 = vector.shape_cast %11 : vector<1x24x128xbf16> to vector<24x128xbf16>
    %c2 = arith.constant 2 : index
    %c0_11 = arith.constant 0 : index
    %c0_12 = arith.constant 0 : index
    %13 = vector.load %arg2[%c2, %c0_11, %c0_12] : memref<4x128x128xbf16, #tpu.memory_space<vmem>>, vector<1x128x128xbf16>
    %14 = vector.shape_cast %13 : vector<1x128x128xbf16> to vector<128x128xbf16>
    %cst_13 = arith.constant dense<0.000000e+00> : vector<24x128xf32>
    %15 = tpu.matmul %12, %14, %cst_13 {dimension_numbers = #tpu.dot_dimension_numbers<[1], [0], [0], [1], [0, 0, 1, 1], [], []>} : vector<24x128xbf16>, vector<128x128xbf16>, vector<24x128xf32> -> vector<24x128xf32>
    %16 = arith.addf %10, %15 : vector<24x128xf32>
    %c0_14 = arith.constant 0 : index
    %c13 = arith.constant 13 : index
    %c0_15 = arith.constant 0 : index
    %17 = vector.load %arg1[%c0_14, %c13, %c0_15] : memref<1x40x128xbf16, #tpu.memory_space<vmem>>, vector<1x24x128xbf16>
    %18 = vector.shape_cast %17 : vector<1x24x128xbf16> to vector<24x128xbf16>
    %c3 = arith.constant 3 : index
    %c0_16 = arith.constant 0 : index
    %c0_17 = arith.constant 0 : index
    %19 = vector.load %arg2[%c3, %c0_16, %c0_17] : memref<4x128x128xbf16, #tpu.memory_space<vmem>>, vector<1x128x128xbf16>
    %20 = vector.shape_cast %19 : vector<1x128x128xbf16> to vector<128x128xbf16>
    %cst_18 = arith.constant dense<0.000000e+00> : vector<24x128xf32>
    %21 = tpu.matmul %18, %20, %cst_18 {dimension_numbers = #tpu.dot_dimension_numbers<[1], [0], [0], [1], [0, 0, 1, 1], [], []>} : vector<24x128xbf16>, vector<128x128xbf16>, vector<24x128xf32> -> vector<24x128xf32>
    %22 = arith.addf %16, %21 : vector<24x128xf32>
    %23 = arith.truncf %22 : vector<24x128xf32> to vector<24x128xbf16>
    %c0_19 = arith.constant 0 : index
    %c0_20 = arith.constant 0 : index
    %c0_21 = arith.constant 0 : index
    %24 = vector.load %arg3[%c0_19, %c0_20, %c0_21] : memref<1x24x128xbf16, #tpu.memory_space<vmem>>, vector<1x24x128xbf16>
    %25 = vector.shape_cast %24 : vector<1x24x128xbf16> to vector<24x128xbf16>
    %26 = vector.shape_cast %23 : vector<24x128xbf16> to vector<1x24x128xbf16>
    tpu.vector_store %arg3[%c0_19, %c0_20, %c0_21], %26 {strides = array<i32>} : memref<1x24x128xbf16, #tpu.memory_space<vmem>>, vector<1x24x128xbf16>,
    return
  }
  func.func @transform_0(%arg0: i32) -> (i32, i32, i32) {
    %c0_i32 = arith.constant 0 : i32
    %c0_i32_0 = arith.constant 0 : i32
    %c0_i32_1 = arith.constant 0 : i32
    return %arg0, %c0_i32, %c0_i32_0 : i32, i32, i32
  }
  func.func @transform_1(%arg0: i32) -> (i32, i32, i32) {
    %c0_i32 = arith.constant 0 : i32
    %c0_i32_0 = arith.constant 0 : i32
    %c0_i32_1 = arith.constant 0 : i32
    %c0_i32_2 = arith.constant 0 : i32
    return %c0_i32, %c0_i32_0, %c0_i32_1 : i32, i32, i32
  }
  func.func @transform_2(%arg0: i32) -> (i32, i32, i32) {
    %c0_i32 = arith.constant 0 : i32
    %c0_i32_0 = arith.constant 0 : i32
    %c0_i32_1 = arith.constant 0 : i32
    return %arg0, %c0_i32, %c0_i32_0 : i32, i32, i32
  }
}

module attributes {stable_mosaic.version = 11 : i64} {
  func.func @_subpix_phase_kernel(%arg0: i32, %arg1: memref<1x40x128xbf16, #tpu.memory_space<vmem>>, %arg2: memref<4x128x128xbf16, #tpu.memory_space<vmem>>, %arg3: memref<1x24x128xbf16, #tpu.memory_space<vmem>>) attributes {dimension_semantics = [#tpu.dimension_semantics<parallel>], iteration_bounds = array<i64: 2>, scalar_prefetch = 0 : i64, scratch_operands = 0 : i64, tpu.core_type = #tpu.core_type<tc>, window_params = [{transform_indices = @transform_0, window_bounds = array<i64: 1, 40, 128>}, {pipeline_mode = #tpu.pipeline_mode<synchronous>, transform_indices = @transform_1, window_bounds = array<i64: 4, 128, 128>}, {transform_indices = @transform_2, window_bounds = array<i64: 1, 24, 128>}]} {
    %c0 = arith.constant 0 : index
    %c0_0 = arith.constant 0 : index
    %c0_1 = arith.constant 0 : index
    %0 = vector.load %arg1[%c0, %c0_0, %c0_1] : memref<1x40x128xbf16, #tpu.memory_space<vmem>>, vector<1x24x128xbf16>
    %1 = vector.shape_cast %0 : vector<1x24x128xbf16> to vector<24x128xbf16>
    %c0_2 = arith.constant 0 : index
    %c0_3 = arith.constant 0 : index
    %c0_4 = arith.constant 0 : index
    %2 = vector.load %arg2[%c0_2, %c0_3, %c0_4] : memref<4x128x128xbf16, #tpu.memory_space<vmem>>, vector<1x128x128xbf16>
    %3 = vector.shape_cast %2 : vector<1x128x128xbf16> to vector<128x128xbf16>
    %cst = arith.constant dense<0.000000e+00> : vector<24x128xf32>
    %4 = tpu.matmul %1, %3, %cst {dimension_numbers = #tpu.dot_dimension_numbers<[1], [0], [0], [1], [0, 0, 1, 1], [], []>} : vector<24x128xbf16>, vector<128x128xbf16>, vector<24x128xf32> -> vector<24x128xf32>
    %c0_5 = arith.constant 0 : index
    %c1 = arith.constant 1 : index
    %c0_6 = arith.constant 0 : index
    %5 = vector.load %arg1[%c0_5, %c1, %c0_6] : memref<1x40x128xbf16, #tpu.memory_space<vmem>>, vector<1x24x128xbf16>
    %6 = vector.shape_cast %5 : vector<1x24x128xbf16> to vector<24x128xbf16>
    %c1_7 = arith.constant 1 : index
    %c0_8 = arith.constant 0 : index
    %c0_9 = arith.constant 0 : index
    %7 = vector.load %arg2[%c1_7, %c0_8, %c0_9] : memref<4x128x128xbf16, #tpu.memory_space<vmem>>, vector<1x128x128xbf16>
    %8 = vector.shape_cast %7 : vector<1x128x128xbf16> to vector<128x128xbf16>
    %cst_10 = arith.constant dense<0.000000e+00> : vector<24x128xf32>
    %9 = tpu.matmul %6, %8, %cst_10 {dimension_numbers = #tpu.dot_dimension_numbers<[1], [0], [0], [1], [0, 0, 1, 1], [], []>} : vector<24x128xbf16>, vector<128x128xbf16>, vector<24x128xf32> -> vector<24x128xf32>
    %10 = arith.addf %4, %9 : vector<24x128xf32>
    %c0_11 = arith.constant 0 : index
    %c6 = arith.constant 6 : index
    %c0_12 = arith.constant 0 : index
    %11 = vector.load %arg1[%c0_11, %c6, %c0_12] : memref<1x40x128xbf16, #tpu.memory_space<vmem>>, vector<1x24x128xbf16>
    %12 = vector.shape_cast %11 : vector<1x24x128xbf16> to vector<24x128xbf16>
    %c2 = arith.constant 2 : index
    %c0_13 = arith.constant 0 : index
    %c0_14 = arith.constant 0 : index
    %13 = vector.load %arg2[%c2, %c0_13, %c0_14] : memref<4x128x128xbf16, #tpu.memory_space<vmem>>, vector<1x128x128xbf16>
    %14 = vector.shape_cast %13 : vector<1x128x128xbf16> to vector<128x128xbf16>
    %cst_15 = arith.constant dense<0.000000e+00> : vector<24x128xf32>
    %15 = tpu.matmul %12, %14, %cst_15 {dimension_numbers = #tpu.dot_dimension_numbers<[1], [0], [0], [1], [0, 0, 1, 1], [], []>} : vector<24x128xbf16>, vector<128x128xbf16>, vector<24x128xf32> -> vector<24x128xf32>
    %16 = arith.addf %10, %15 : vector<24x128xf32>
    %c0_16 = arith.constant 0 : index
    %c7 = arith.constant 7 : index
    %c0_17 = arith.constant 0 : index
    %17 = vector.load %arg1[%c0_16, %c7, %c0_17] : memref<1x40x128xbf16, #tpu.memory_space<vmem>>, vector<1x24x128xbf16>
    %18 = vector.shape_cast %17 : vector<1x24x128xbf16> to vector<24x128xbf16>
    %c3 = arith.constant 3 : index
    %c0_18 = arith.constant 0 : index
    %c0_19 = arith.constant 0 : index
    %19 = vector.load %arg2[%c3, %c0_18, %c0_19] : memref<4x128x128xbf16, #tpu.memory_space<vmem>>, vector<1x128x128xbf16>
    %20 = vector.shape_cast %19 : vector<1x128x128xbf16> to vector<128x128xbf16>
    %cst_20 = arith.constant dense<0.000000e+00> : vector<24x128xf32>
    %21 = tpu.matmul %18, %20, %cst_20 {dimension_numbers = #tpu.dot_dimension_numbers<[1], [0], [0], [1], [0, 0, 1, 1], [], []>} : vector<24x128xbf16>, vector<128x128xbf16>, vector<24x128xf32> -> vector<24x128xf32>
    %22 = arith.addf %16, %21 : vector<24x128xf32>
    %23 = arith.truncf %22 : vector<24x128xf32> to vector<24x128xbf16>
    %c0_21 = arith.constant 0 : index
    %c0_22 = arith.constant 0 : index
    %c0_23 = arith.constant 0 : index
    %24 = vector.load %arg3[%c0_21, %c0_22, %c0_23] : memref<1x24x128xbf16, #tpu.memory_space<vmem>>, vector<1x24x128xbf16>
    %25 = vector.shape_cast %24 : vector<1x24x128xbf16> to vector<24x128xbf16>
    %26 = vector.shape_cast %23 : vector<24x128xbf16> to vector<1x24x128xbf16>
    tpu.vector_store %arg3[%c0_21, %c0_22, %c0_23], %26 {strides = array<i32>} : memref<1x24x128xbf16, #tpu.memory_space<vmem>>, vector<1x24x128xbf16>,
    return
  }
  func.func @transform_0(%arg0: i32) -> (i32, i32, i32) {
    %c0_i32 = arith.constant 0 : i32
    %c0_i32_0 = arith.constant 0 : i32
    %c0_i32_1 = arith.constant 0 : i32
    return %arg0, %c0_i32, %c0_i32_0 : i32, i32, i32
  }
  func.func @transform_1(%arg0: i32) -> (i32, i32, i32) {
    %c0_i32 = arith.constant 0 : i32
    %c0_i32_0 = arith.constant 0 : i32
    %c0_i32_1 = arith.constant 0 : i32
    %c0_i32_2 = arith.constant 0 : i32
    return %c0_i32, %c0_i32_0, %c0_i32_1 : i32, i32, i32
  }
  func.func @transform_2(%arg0: i32) -> (i32, i32, i32) {
    %c0_i32 = arith.constant 0 : i32
    %c0_i32_0 = arith.constant 0 : i32
    %c0_i32_1 = arith.constant 0 : i32
    return %arg0, %c0_i32, %c0_i32_0 : i32, i32, i32
  }
}

module attributes {stable_mosaic.version = 11 : i64} {
  func.func @_subpix_phase_kernel(%arg0: i32, %arg1: memref<1x40x128xbf16, #tpu.memory_space<vmem>>, %arg2: memref<4x128x128xbf16, #tpu.memory_space<vmem>>, %arg3: memref<1x24x128xbf16, #tpu.memory_space<vmem>>) attributes {dimension_semantics = [#tpu.dimension_semantics<parallel>], iteration_bounds = array<i64: 2>, scalar_prefetch = 0 : i64, scratch_operands = 0 : i64, tpu.core_type = #tpu.core_type<tc>, window_params = [{transform_indices = @transform_0, window_bounds = array<i64: 1, 40, 128>}, {pipeline_mode = #tpu.pipeline_mode<synchronous>, transform_indices = @transform_1, window_bounds = array<i64: 4, 128, 128>}, {transform_indices = @transform_2, window_bounds = array<i64: 1, 24, 128>}]} {
    %c0 = arith.constant 0 : index
    %c1 = arith.constant 1 : index
    %c0_0 = arith.constant 0 : index
    %0 = vector.load %arg1[%c0, %c1, %c0_0] : memref<1x40x128xbf16, #tpu.memory_space<vmem>>, vector<1x24x128xbf16>
    %1 = vector.shape_cast %0 : vector<1x24x128xbf16> to vector<24x128xbf16>
    %c0_1 = arith.constant 0 : index
    %c0_2 = arith.constant 0 : index
    %c0_3 = arith.constant 0 : index
    %2 = vector.load %arg2[%c0_1, %c0_2, %c0_3] : memref<4x128x128xbf16, #tpu.memory_space<vmem>>, vector<1x128x128xbf16>
    %3 = vector.shape_cast %2 : vector<1x128x128xbf16> to vector<128x128xbf16>
    %cst = arith.constant dense<0.000000e+00> : vector<24x128xf32>
    %4 = tpu.matmul %1, %3, %cst {dimension_numbers = #tpu.dot_dimension_numbers<[1], [0], [0], [1], [0, 0, 1, 1], [], []>} : vector<24x128xbf16>, vector<128x128xbf16>, vector<24x128xf32> -> vector<24x128xf32>
    %c0_4 = arith.constant 0 : index
    %c2 = arith.constant 2 : index
    %c0_5 = arith.constant 0 : index
    %5 = vector.load %arg1[%c0_4, %c2, %c0_5] : memref<1x40x128xbf16, #tpu.memory_space<vmem>>, vector<1x24x128xbf16>
    %6 = vector.shape_cast %5 : vector<1x24x128xbf16> to vector<24x128xbf16>
    %c1_6 = arith.constant 1 : index
    %c0_7 = arith.constant 0 : index
    %c0_8 = arith.constant 0 : index
    %7 = vector.load %arg2[%c1_6, %c0_7, %c0_8] : memref<4x128x128xbf16, #tpu.memory_space<vmem>>, vector<1x128x128xbf16>
    %8 = vector.shape_cast %7 : vector<1x128x128xbf16> to vector<128x128xbf16>
    %cst_9 = arith.constant dense<0.000000e+00> : vector<24x128xf32>
    %9 = tpu.matmul %6, %8, %cst_9 {dimension_numbers = #tpu.dot_dimension_numbers<[1], [0], [0], [1], [0, 0, 1, 1], [], []>} : vector<24x128xbf16>, vector<128x128xbf16>, vector<24x128xf32> -> vector<24x128xf32>
    %10 = arith.addf %4, %9 : vector<24x128xf32>
    %c0_10 = arith.constant 0 : index
    %c7 = arith.constant 7 : index
    %c0_11 = arith.constant 0 : index
    %11 = vector.load %arg1[%c0_10, %c7, %c0_11] : memref<1x40x128xbf16, #tpu.memory_space<vmem>>, vector<1x24x128xbf16>
    %12 = vector.shape_cast %11 : vector<1x24x128xbf16> to vector<24x128xbf16>
    %c2_12 = arith.constant 2 : index
    %c0_13 = arith.constant 0 : index
    %c0_14 = arith.constant 0 : index
    %13 = vector.load %arg2[%c2_12, %c0_13, %c0_14] : memref<4x128x128xbf16, #tpu.memory_space<vmem>>, vector<1x128x128xbf16>
    %14 = vector.shape_cast %13 : vector<1x128x128xbf16> to vector<128x128xbf16>
    %cst_15 = arith.constant dense<0.000000e+00> : vector<24x128xf32>
    %15 = tpu.matmul %12, %14, %cst_15 {dimension_numbers = #tpu.dot_dimension_numbers<[1], [0], [0], [1], [0, 0, 1, 1], [], []>} : vector<24x128xbf16>, vector<128x128xbf16>, vector<24x128xf32> -> vector<24x128xf32>
    %16 = arith.addf %10, %15 : vector<24x128xf32>
    %c0_16 = arith.constant 0 : index
    %c8 = arith.constant 8 : index
    %c0_17 = arith.constant 0 : index
    %17 = vector.load %arg1[%c0_16, %c8, %c0_17] : memref<1x40x128xbf16, #tpu.memory_space<vmem>>, vector<1x24x128xbf16>
    %18 = vector.shape_cast %17 : vector<1x24x128xbf16> to vector<24x128xbf16>
    %c3 = arith.constant 3 : index
    %c0_18 = arith.constant 0 : index
    %c0_19 = arith.constant 0 : index
    %19 = vector.load %arg2[%c3, %c0_18, %c0_19] : memref<4x128x128xbf16, #tpu.memory_space<vmem>>, vector<1x128x128xbf16>
    %20 = vector.shape_cast %19 : vector<1x128x128xbf16> to vector<128x128xbf16>
    %cst_20 = arith.constant dense<0.000000e+00> : vector<24x128xf32>
    %21 = tpu.matmul %18, %20, %cst_20 {dimension_numbers = #tpu.dot_dimension_numbers<[1], [0], [0], [1], [0, 0, 1, 1], [], []>} : vector<24x128xbf16>, vector<128x128xbf16>, vector<24x128xf32> -> vector<24x128xf32>
    %22 = arith.addf %16, %21 : vector<24x128xf32>
    %23 = arith.truncf %22 : vector<24x128xf32> to vector<24x128xbf16>
    %c0_21 = arith.constant 0 : index
    %c0_22 = arith.constant 0 : index
    %c0_23 = arith.constant 0 : index
    %24 = vector.load %arg3[%c0_21, %c0_22, %c0_23] : memref<1x24x128xbf16, #tpu.memory_space<vmem>>, vector<1x24x128xbf16>
    %25 = vector.shape_cast %24 : vector<1x24x128xbf16> to vector<24x128xbf16>
    %26 = vector.shape_cast %23 : vector<24x128xbf16> to vector<1x24x128xbf16>
    tpu.vector_store %arg3[%c0_21, %c0_22, %c0_23], %26 {strides = array<i32>} : memref<1x24x128xbf16, #tpu.memory_space<vmem>>, vector<1x24x128xbf16>,
    return
  }
  func.func @transform_0(%arg0: i32) -> (i32, i32, i32) {
    %c0_i32 = arith.constant 0 : i32
    %c0_i32_0 = arith.constant 0 : i32
    %c0_i32_1 = arith.constant 0 : i32
    return %arg0, %c0_i32, %c0_i32_0 : i32, i32, i32
  }
  func.func @transform_1(%arg0: i32) -> (i32, i32, i32) {
    %c0_i32 = arith.constant 0 : i32
    %c0_i32_0 = arith.constant 0 : i32
    %c0_i32_1 = arith.constant 0 : i32
    %c0_i32_2 = arith.constant 0 : i32
    return %c0_i32, %c0_i32_0, %c0_i32_1 : i32, i32, i32
  }
  func.func @transform_2(%arg0: i32) -> (i32, i32, i32) {
    %c0_i32 = arith.constant 0 : i32
    %c0_i32_0 = arith.constant 0 : i32
    %c0_i32_1 = arith.constant 0 : i32
    return %arg0, %c0_i32, %c0_i32_0 : i32, i32, i32
  }
}

module attributes {stable_mosaic.version = 11 : i64} {
  func.func @_subpix_phase_kernel(%arg0: i32, %arg1: memref<1x40x128xbf16, #tpu.memory_space<vmem>>, %arg2: memref<4x128x128xbf16, #tpu.memory_space<vmem>>, %arg3: memref<1x24x128xbf16, #tpu.memory_space<vmem>>) attributes {dimension_semantics = [#tpu.dimension_semantics<parallel>], iteration_bounds = array<i64: 2>, scalar_prefetch = 0 : i64, scratch_operands = 0 : i64, tpu.core_type = #tpu.core_type<tc>, window_params = [{transform_indices = @transform_0, window_bounds = array<i64: 1, 40, 128>}, {pipeline_mode = #tpu.pipeline_mode<synchronous>, transform_indices = @transform_1, window_bounds = array<i64: 4, 128, 128>}, {transform_indices = @transform_2, window_bounds = array<i64: 1, 24, 128>}]} {
    %c0 = arith.constant 0 : index
    %c7 = arith.constant 7 : index
    %c0_0 = arith.constant 0 : index
    %0 = vector.load %arg1[%c0, %c7, %c0_0] : memref<1x40x128xbf16, #tpu.memory_space<vmem>>, vector<1x24x128xbf16>
    %1 = vector.shape_cast %0 : vector<1x24x128xbf16> to vector<24x128xbf16>
    %c0_1 = arith.constant 0 : index
    %c0_2 = arith.constant 0 : index
    %c0_3 = arith.constant 0 : index
    %2 = vector.load %arg2[%c0_1, %c0_2, %c0_3] : memref<4x128x128xbf16, #tpu.memory_space<vmem>>, vector<1x128x128xbf16>
    %3 = vector.shape_cast %2 : vector<1x128x128xbf16> to vector<128x128xbf16>
    %cst = arith.constant dense<0.000000e+00> : vector<24x128xf32>
    %4 = tpu.matmul %1, %3, %cst {dimension_numbers = #tpu.dot_dimension_numbers<[1], [0], [0], [1], [0, 0, 1, 1], [], []>} : vector<24x128xbf16>, vector<128x128xbf16>, vector<24x128xf32> -> vector<24x128xf32>
    %c0_4 = arith.constant 0 : index
    %c8 = arith.constant 8 : index
    %c0_5 = arith.constant 0 : index
    %5 = vector.load %arg1[%c0_4, %c8, %c0_5] : memref<1x40x128xbf16, #tpu.memory_space<vmem>>, vector<1x24x128xbf16>
    %6 = vector.shape_cast %5 : vector<1x24x128xbf16> to vector<24x128xbf16>
    %c1 = arith.constant 1 : index
    %c0_6 = arith.constant 0 : index
    %c0_7 = arith.constant 0 : index
    %7 = vector.load %arg2[%c1, %c0_6, %c0_7] : memref<4x128x128xbf16, #tpu.memory_space<vmem>>, vector<1x128x128xbf16>
    %8 = vector.shape_cast %7 : vector<1x128x128xbf16> to vector<128x128xbf16>
    %cst_8 = arith.constant dense<0.000000e+00> : vector<24x128xf32>
    %9 = tpu.matmul %6, %8, %cst_8 {dimension_numbers = #tpu.dot_dimension_numbers<[1], [0], [0], [1], [0, 0, 1, 1], [], []>} : vector<24x128xbf16>, vector<128x128xbf16>, vector<24x128xf32> -> vector<24x128xf32>
    %10 = arith.addf %4, %9 : vector<24x128xf32>
    %c0_9 = arith.constant 0 : index
    %c13 = arith.constant 13 : index
    %c0_10 = arith.constant 0 : index
    %11 = vector.load %arg1[%c0_9, %c13, %c0_10] : memref<1x40x128xbf16, #tpu.memory_space<vmem>>, vector<1x24x128xbf16>
    %12 = vector.shape_cast %11 : vector<1x24x128xbf16> to vector<24x128xbf16>
    %c2 = arith.constant 2 : index
    %c0_11 = arith.constant 0 : index
    %c0_12 = arith.constant 0 : index
    %13 = vector.load %arg2[%c2, %c0_11, %c0_12] : memref<4x128x128xbf16, #tpu.memory_space<vmem>>, vector<1x128x128xbf16>
    %14 = vector.shape_cast %13 : vector<1x128x128xbf16> to vector<128x128xbf16>
    %cst_13 = arith.constant dense<0.000000e+00> : vector<24x128xf32>
    %15 = tpu.matmul %12, %14, %cst_13 {dimension_numbers = #tpu.dot_dimension_numbers<[1], [0], [0], [1], [0, 0, 1, 1], [], []>} : vector<24x128xbf16>, vector<128x128xbf16>, vector<24x128xf32> -> vector<24x128xf32>
    %16 = arith.addf %10, %15 : vector<24x128xf32>
    %c0_14 = arith.constant 0 : index
    %c14 = arith.constant 14 : index
    %c0_15 = arith.constant 0 : index
    %17 = vector.load %arg1[%c0_14, %c14, %c0_15] : memref<1x40x128xbf16, #tpu.memory_space<vmem>>, vector<1x24x128xbf16>
    %18 = vector.shape_cast %17 : vector<1x24x128xbf16> to vector<24x128xbf16>
    %c3 = arith.constant 3 : index
    %c0_16 = arith.constant 0 : index
    %c0_17 = arith.constant 0 : index
    %19 = vector.load %arg2[%c3, %c0_16, %c0_17] : memref<4x128x128xbf16, #tpu.memory_space<vmem>>, vector<1x128x128xbf16>
    %20 = vector.shape_cast %19 : vector<1x128x128xbf16> to vector<128x128xbf16>
    %cst_18 = arith.constant dense<0.000000e+00> : vector<24x128xf32>
    %21 = tpu.matmul %18, %20, %cst_18 {dimension_numbers = #tpu.dot_dimension_numbers<[1], [0], [0], [1], [0, 0, 1, 1], [], []>} : vector<24x128xbf16>, vector<128x128xbf16>, vector<24x128xf32> -> vector<24x128xf32>
    %22 = arith.addf %16, %21 : vector<24x128xf32>
    %23 = arith.truncf %22 : vector<24x128xf32> to vector<24x128xbf16>
    %c0_19 = arith.constant 0 : index
    %c0_20 = arith.constant 0 : index
    %c0_21 = arith.constant 0 : index
    %24 = vector.load %arg3[%c0_19, %c0_20, %c0_21] : memref<1x24x128xbf16, #tpu.memory_space<vmem>>, vector<1x24x128xbf16>
    %25 = vector.shape_cast %24 : vector<1x24x128xbf16> to vector<24x128xbf16>
    %26 = vector.shape_cast %23 : vector<24x128xbf16> to vector<1x24x128xbf16>
    tpu.vector_store %arg3[%c0_19, %c0_20, %c0_21], %26 {strides = array<i32>} : memref<1x24x128xbf16, #tpu.memory_space<vmem>>, vector<1x24x128xbf16>,
    return
  }
  func.func @transform_0(%arg0: i32) -> (i32, i32, i32) {
    %c0_i32 = arith.constant 0 : i32
    %c0_i32_0 = arith.constant 0 : i32
    %c0_i32_1 = arith.constant 0 : i32
    return %arg0, %c0_i32, %c0_i32_0 : i32, i32, i32
  }
  func.func @transform_1(%arg0: i32) -> (i32, i32, i32) {
    %c0_i32 = arith.constant 0 : i32
    %c0_i32_0 = arith.constant 0 : i32
    %c0_i32_1 = arith.constant 0 : i32
    %c0_i32_2 = arith.constant 0 : i32
    return %c0_i32, %c0_i32_0, %c0_i32_1 : i32, i32, i32
  }
  func.func @transform_2(%arg0: i32) -> (i32, i32, i32) {
    %c0_i32 = arith.constant 0 : i32
    %c0_i32_0 = arith.constant 0 : i32
    %c0_i32_1 = arith.constant 0 : i32
    return %arg0, %c0_i32, %c0_i32_0 : i32, i32, i32
  }
}

</mosaic_0001>

<llo_original>
// kernel: _conv_t_s2_pallas_test.4
$region0: #{_conv_t_s2_pallas_test.4}
  #allocation0 [shape = 'u32[]', space=smem, size = 0x4, offset = 0x4, fixed_abs, tag = 'smem constant byte address 0x4 - core index']
  #allocation1 [shape = 'u32[72,128]{1,0:T(1,128)}', space=vmem, size = 0x9000, scoped, tag = 'internal scratch']
  %s0 = inlined_call_operand.vmem [shape: bf16[2,40,128], index: 0, kind: input, shape index: {}]
  %s1 = inlined_call_operand.vmem [shape: bf16[4,128,128], index: 1, kind: input, shape index: {}]
  %s2 = inlined_call_operand.vmem [shape: bf16[2,24,128], index: 2, kind: output, shape index: {}]
  %s3 = sld [smem:[#allocation0]]
  $region41: #{_conv_t_s2_pallas_test.4} parent=0
    _
  %s5 = ssub.s32 1, %s3
  %s6 = scalar_select 0, %s5, %s3
  loop: start=0, step=1, limit=4
  $region2: #{_conv_t_s2_pallas_test.4} parent=0 // loop_pre_header
    _
  $region3: #{_conv_t_s2_pallas_test.4} parent=0 // loop_header
    %s8 = sphi 0, %s12
    %p9 = scmp.ge.s32.totalorder %s8, 4
    %s18 = sphi 0, %s20
    %s21 = sphi 0, %s18
    %s22 = sphi 0, %s21
    %s38 = sphi 0, %s22
    %s42 = sphi 0, %s42
    %s44 = sphi 0, %s42
    %s45 = sphi 0, %s44
    %s59 = sphi 0, %s45
    %s65 = sphi 0, %s67
    %s68 = sphi 0, %s65
    %s69 = sphi 0, %s68
    %s85 = sphi 0, %s69
  $region4: #{_conv_t_s2_pallas_test.4} parent=0 // loop_header_branch
    %11 = sbr.rel (%p9) target = $region8
  $region5: #{_conv_t_s2_pallas_test.4} parent=0 // loop_body
    %s13 = ssub.s32 %s8, 1
    %s14 = ssub.s32 %s8, 2
    %s15 = sadd.s32 %s8, 1
    %s16 = ssub.s32 %s8, %s15
    %p17 = scmp.eq.s32.totalorder %s16, 0
    %s19 = sadd.s32 %s18, 1
    %s20 = scalar_select %p17, %s18, %s19
    %p23 = pneg %p17
    %p24 = scmp.eq.s32.totalorder %s8, 1
    %p25 = por %p23, %p24
    %p26 = scmp.ne.s32.totalorder %s18, %s21
    %p27 = scmp.eq.s32.totalorder %s8, 0
    %p28 = por %p26, %p27
    %p29 = scmp.ne.s32.totalorder %s18, %s21
    %p30 = scmp.eq.s32.totalorder %s13, 1
    %p31 = por %p29, %p30
    %p32 = scmp.ne.s32.totalorder %s21, %s22
    %p33 = scmp.eq.s32.totalorder %s13, 0
    %p34 = por %p32, %p33
    %p35 = scmp.ne.s32.totalorder %s21, %s22
    %p36 = scmp.eq.s32.totalorder %s14, 1
    %p37 = por %p35, %p36
    %p39 = scmp.ne.s32.totalorder %s22, %s38
    %p40 = scmp.eq.s32.totalorder %s14, 0
    %p41 = por %p39, %p40
    %s43 = sadd.s32 %s42, 1
    %p46 = scmp.eq.s32.totalorder %s8, 1
    %p47 = scmp.ne.s32.totalorder %s42, %s44
    %p48 = scmp.eq.s32.totalorder %s8, 0
    %p49 = por %p47, %p48
    %p50 = scmp.ne.s32.totalorder %s42, %s44
    %p51 = scmp.eq.s32.totalorder %s13, 1
    %p52 = por %p50, %p51
    %p53 = scmp.ne.s32.totalorder %s44, %s45
    %p54 = scmp.eq.s32.totalorder %s13, 0
    %p55 = por %p53, %p54
    %p56 = scmp.ne.s32.totalorder %s44, %s45
    %p57 = scmp.eq.s32.totalorder %s14, 1
    %p58 = por %p56, %p57
    %p60 = scmp.ne.s32.totalorder %s45, %s59
    %p61 = scmp.eq.s32.totalorder %s14, 0
    %p62 = por %p60, %p61
    %s63 = ssub.s32 %s8, %s15
    %p64 = scmp.eq.s32.totalorder %s63, 0
    %s66 = sadd.s32 %s65, 1
    %s67 = scalar_select %p64, %s65, %s66
    %p70 = pneg %p64
    %p71 = scmp.eq.s32.totalorder %s8, 1
    %p72 = por %p70, %p71
    %p73 = scmp.ne.s32.totalorder %s65, %s68
    %p74 = scmp.eq.s32.totalorder %s8, 0
    %p75 = por %p73, %p74
    %p76 = scmp.ne.s32.totalorder %s65, %s68
    %p77 = scmp.eq.s32.totalorder %s13, 1
    %p78 = por %p76, %p77
    %p79 = scmp.ne.s32.totalorder %s68, %s69
    %p80 = scmp.eq.s32.totalorder %s13, 0
    %p81 = por %p79, %p80
    %p82 = scmp.ne.s32.totalorder %s68, %s69
    %p83 = scmp.eq.s32.totalorder %s14, 1
    %p84 = por %p82, %p83
    %p86 = scmp.ne.s32.totalorder %s69, %s85
    %p87 = scmp.eq.s32.totalorder %s14, 0
    %p88 = por %p86, %p87
    %p89 = scmp.le.s32.totalorder 1, %s8
    %p90 = scmp.lt.s32.totalorder %s8, 3
    %p91 = pnand %p89, %p90
    %p92 = pneg %p91
    // Predicated region
    $region9: #{_conv_t_s2_pallas_test.4} parent=5 // pred_check
      _
    $region10: #{_conv_t_s2_pallas_test.4} parent=5 // pred_check_branch
      %94 = sbr.rel (%p91) target = $region12
    $region11: #{_conv_t_s2_pallas_test.4} parent=5 // pred_region
      %s95 = ssub.s32 %s8, 1
      // Predicated region
      $region13: #{_conv_t_s2_pallas_test.4} parent=11 // pred_check
        %p96 = pneg %p55
      $region14: #{_conv_t_s2_pallas_test.4} parent=11 // pred_check_branch
        %98 = sbr.rel (%p96) target = $region16
      $region15: #{_conv_t_s2_pallas_test.4} parent=11 // pred_region
        _
      $region16: #{_conv_t_s2_pallas_test.4} parent=11 // pred_fallthru
        _
    $region12: #{_conv_t_s2_pallas_test.4} parent=5 // pred_fallthru
      _
    %p99 = scmp.lt.s32.totalorder %s8, 2
    // Predicated region
    $region17: #{_conv_t_s2_pallas_test.4} parent=5 // pred_check
      %p100 = pneg %p99
    $region18: #{_conv_t_s2_pallas_test.4} parent=5 // pred_check_branch
      %102 = sbr.rel (%p100) target = $region20
    $region19: #{_conv_t_s2_pallas_test.4} parent=5 // pred_region
      // Predicated region
      $region21: #{_conv_t_s2_pallas_test.4} parent=19 // pred_check
        %p103 = pneg %p28
      $region22: #{_conv_t_s2_pallas_test.4} parent=19 // pred_check_branch
        %105 = sbr.rel (%p103) target = $region24
      $region23: #{_conv_t_s2_pallas_test.4} parent=19 // pred_region
        %p106 = scmp.lt.s32.totalorder %s8, 1
        %s107 = scalar_select %p106, %s8, 1
        %s108 = smul.addr %s107, 5
        %s109 = smul.addr %s108, 4
        %s110 = scalar_lea.vmem %s0, %s109
      $region24: #{_conv_t_s2_pallas_test.4} parent=19 // pred_fallthru
        _
    $region20: #{_conv_t_s2_pallas_test.4} parent=5 // pred_fallthru
      _
    %p111 = scmp.le.s32.totalorder 1, %s8
    %p112 = scmp.lt.s32.totalorder %s8, 3
    %p113 = pnand %p111, %p112
    %p114 = pneg %p113
    // Predicated region
    $region25: #{_conv_t_s2_pallas_test.4} parent=5 // pred_check
      _
    $region26: #{_conv_t_s2_pallas_test.4} parent=5 // pred_check_branch
      %116 = sbr.rel (%p113) target = $region28
    $region27: #{_conv_t_s2_pallas_test.4} parent=5 // pred_region
      %s117 = ssub.s32 %s8, 1
      %p118 = scmp.lt.s32.totalorder %s13, 1
      %s119 = scalar_select %p118, %s13, 1
      %s120 = smul.addr %s119, 5
      %s121 = smul.addr %s120, 4
      %s122 = scalar_lea.vmem %s0, %s121
      %p123 = pneg %p34
      %p124 = pneg %p31
      %p125 = pneg %p55
      %p126 = pneg %p52
      %p127 = pneg %p81
      %p128 = pneg %p78
      %p129 = scmp.lt.s32.totalorder %s13, 1
      %s130 = scalar_select %p129, %s13, 1
      %s131 = smul.addr %s130, 3
      %s132 = smul.addr %s131, 4
      %s133 = scalar_lea.vmem %s2, %s132
      %p134 = scmp.lt.s32.totalorder %s13, 1
      %s135 = scalar_select %p134, %s13, 1
      %s136 = smul.addr %s135, 5
      %s137 = smul.addr %s136, 4
      %s138 = scalar_lea.vmem %s0, %s137
      %p139 = scmp.lt.s32.totalorder %s13, 1
      %s140 = scalar_select %p139, %s13, 1
      %s141 = smul.addr %s140, 3
      %s142 = smul.addr %s141, 4
      %s143 = scalar_lea.vmem %s2, %s142
      %v144 = vld [vmem:[%s138] sm:$0xf]
      %v145 = vld [vmem:[%s138 + $0x4] sm:$0xf]
      %v146 = vld [vmem:[%s138 + $0x8] sm:$0xf]
      %v147 = vld [vmem:[%s1] sm:$0xf]
      %v148 = vld [vmem:[%s1 + $0x4] sm:$0xf]
      %v149 = vld [vmem:[%s1 + $0x8] sm:$0xf]
      %v150 = vld [vmem:[%s1 + $0xc] sm:$0xf]
      %v151 = vld [vmem:[%s1 + $0x10] sm:$0xf]
      %v152 = vld [vmem:[%s1 + $0x14] sm:$0xf]
      %v153 = vld [vmem:[%s1 + $0x18] sm:$0xf]
      %v154 = vld [vmem:[%s1 + $0x1c] sm:$0xf]
      %v155 = vld [vmem:[%s1 + $0x20] sm:$0xf]
      %v156 = vld [vmem:[%s1 + $0x24] sm:$0xf]
      %v157 = vld [vmem:[%s1 + $0x28] sm:$0xf]
      %v158 = vld [vmem:[%s1 + $0x2c] sm:$0xf]
      %v159 = vld [vmem:[%s1 + $0x30] sm:$0xf]
      %v160 = vld [vmem:[%s1 + $0x34] sm:$0xf]
      %v161 = vld [vmem:[%s1 + $0x38] sm:$0xf]
      %v162 = vld [vmem:[%s1 + $0x3c] sm:$0xf]
      %v163 = vld [vmem:[%s138 + $0xc] sm:$0x1]
      %s164 = scalar_lea.vmem %s1, 64
      %v165 = vld [vmem:[%s164] sm:$0xf]
      %v166 = vld [vmem:[%s164 + $0x4] sm:$0xf]
      %v167 = vld [vmem:[%s164 + $0x8] sm:$0xf]
      %v168 = vld [vmem:[%s164 + $0xc] sm:$0xf]
      %v169 = vld [vmem:[%s164 + $0x10] sm:$0xf]
      %v170 = vld [vmem:[%s164 + $0x14] sm:$0xf]
      %v171 = vld [vmem:[%s164 + $0x18] sm:$0xf]
      %v172 = vld [vmem:[%s164 + $0x1c] sm:$0xf]
      %v173 = vld [vmem:[%s164 + $0x20] sm:$0xf]
      %v174 = vld [vmem:[%s164 + $0x24] sm:$0xf]
      %v175 = vld [vmem:[%s164 + $0x28] sm:$0xf]
      %v176 = vld [vmem:[%s164 + $0x2c] sm:$0xf]
      %v177 = vld [vmem:[%s164 + $0x30] sm:$0xf]
      %v178 = vld [vmem:[%s164 + $0x34] sm:$0xf]
      %v179 = vld [vmem:[%s164 + $0x38] sm:$0xf]
      %v180 = vld [vmem:[%s164 + $0x3c] sm:$0xf]
      %v185 = vunpack.c.l.b16 %v144
      %v186 = vunpack.c.l.b16 %v145
      %v187 = vunpack.c.l.b16 %v146
      %v188 = vunpack.c.l.b16 %v163
      %v189 = vpack.c.b16 %v186, %v185
      %v190 = vpack.c.b16 %v188, %v187
      %vm191 = vsmask.f32 7424
      %v193 = vshrl.u32 %v189, 16
      %v195 = vshll.u32 %v189, 16
      %v197 = vrot.slane %v195, 1
      %v198 = vor.u32 %v193, %v197
      %v200 = vshll.u32 %v190, 16
      %v202 = vrot.slane %v200, 1
      %v203 = vsel %vm191, %v198, %v202
      %v204 = vshrl.u32 %v190, 16
      %v206 = vor.u32 %v204, %v202
      %v225 = vunpack.c.l.b16 %v165
      %v226 = vunpack.c.l.b16 %v166
      %v227 = vunpack.c.l.b16 %v167
      %v228 = vunpack.c.l.b16 %v168
      %v229 = vunpack.c.l.b16 %v169
      %v230 = vunpack.c.l.b16 %v170
      %v231 = vunpack.c.l.b16 %v171
      %v232 = vunpack.c.l.b16 %v172
      %v233 = vunpack.c.l.b16 %v173
      %v234 = vunpack.c.l.b16 %v174
      %v235 = vunpack.c.l.b16 %v175
      %v236 = vunpack.c.l.b16 %v176
      %v237 = vunpack.c.l.b16 %v177
      %v238 = vunpack.c.l.b16 %v178
      %v239 = vunpack.c.l.b16 %v179
      %v240 = vunpack.c.l.b16 %v180
      %v241 = vpack.c.b16 %v226, %v225
      %v242 = vpack.c.b16 %v228, %v227
      %v243 = vpack.c.b16 %v230, %v229
      %v244 = vpack.c.b16 %v232, %v231
      %v245 = vpack.c.b16 %v234, %v233
      %v246 = vpack.c.b16 %v236, %v235
      %v247 = vpack.c.b16 %v238, %v237
      %v248 = vpack.c.b16 %v240, %v239
      %257 = vmatpush.bf16.msra.mxu0 %v248
      %258 = vmatpush.bf16.msra.mxu0 %v247
      %259 = vmatpush.bf16.msra.mxu0 %v246
      %260 = vmatpush.bf16.msra.mxu0 %v245
      %261 = vmatpush.bf16.msra.mxu0 %v244
      %262 = vmatpush.bf16.msra.mxu0 %v243
      %263 = vmatpush.bf16.msra.mxu0 %v242
      %264 = vmatpush.bf16.msra.mxu0 %v241
      %265 = vmatmul.bf16.gmra.mxu0 %v203
      %v266 = vpop.f32.mrf.mxu0
      %v267 = vadd.f32 0.0, %v266
      %v268 = vpop.f32.mrf.mxu0
      %v269 = vadd.f32 0.0, %v268
      %270 = vmatmul.bf16.gmra.mxu0 %v206
      %v271 = vpop.f32.mrf.mxu0
      %v272 = vadd.f32 0.0, %v271
      %v273 = vpop.f32.mrf.mxu0
      %274 = vdwg.mxu0
      %v275 = vpack.c.b16 %v187, %v187
      %v294 = vunpack.c.l.b16 %v147
      %v295 = vunpack.c.l.b16 %v148
      %v296 = vunpack.c.l.b16 %v149
      %v297 = vunpack.c.l.b16 %v150
      %v298 = vunpack.c.l.b16 %v151
      %v299 = vunpack.c.l.b16 %v152
      %v300 = vunpack.c.l.b16 %v153
      %v301 = vunpack.c.l.b16 %v154
      %v302 = vunpack.c.l.b16 %v155
      %v303 = vunpack.c.l.b16 %v156
      %v304 = vunpack.c.l.b16 %v157
      %v305 = vunpack.c.l.b16 %v158
      %v306 = vunpack.c.l.b16 %v159
      %v307 = vunpack.c.l.b16 %v160
      %v308 = vunpack.c.l.b16 %v161
      %v309 = vunpack.c.l.b16 %v162
      %v310 = vpack.c.b16 %v295, %v294
      %v311 = vpack.c.b16 %v297, %v296
      %v312 = vpack.c.b16 %v299, %v298
      %v313 = vpack.c.b16 %v301, %v300
      %v314 = vpack.c.b16 %v303, %v302
      %v315 = vpack.c.b16 %v305, %v304
      %v316 = vpack.c.b16 %v307, %v306
      %v317 = vpack.c.b16 %v309, %v308
      %326 = vmatpush.bf16.msra.mxu0 %v317
      %327 = vmatpush.bf16.msra.mxu0 %v316
      %328 = vmatpush.bf16.msra.mxu0 %v315
      %329 = vmatpush.bf16.msra.mxu0 %v314
      %330 = vmatpush.bf16.msra.mxu0 %v313
      %331 = vmatpush.bf16.msra.mxu0 %v312
      %332 = vmatpush.bf16.msra.mxu0 %v311
      %333 = vmatpush.bf16.msra.mxu0 %v310
      %334 = vmatmul.bf16.gmra.mxu0 %v189
      %v335 = vpop.f32.mrf.mxu0
      %v336 = vadd.f32 %v267, %v335
      %v337 = vpop.f32.mrf.mxu0
      %v338 = vadd.f32 %v269, %v337
      %339 = vmatmul.bf16.gmra.mxu0 %v275
      %v340 = vpop.f32.mrf.mxu0
      %v341 = vadd.f32 %v272, %v340
      %v342 = vpop.f32.mrf.mxu0
      %343 = vdwg.mxu0
      %v344 = vld [vmem:[%s138] sm:$0x8]
      %v345 = vld [vmem:[%s138 + $0xc] sm:$0x7]
      %s346 = scalar_lea.vmem %s1, 128
      %v347 = vld [vmem:[%s346] sm:$0xf]
      %v348 = vld [vmem:[%s346 + $0x4] sm:$0xf]
      %v349 = vld [vmem:[%s346 + $0x8] sm:$0xf]
      %v350 = vld [vmem:[%s346 + $0xc] sm:$0xf]
      %v351 = vld [vmem:[%s346 + $0x10] sm:$0xf]
      %v352 = vld [vmem:[%s346 + $0x14] sm:$0xf]
      %v353 = vld [vmem:[%s346 + $0x18] sm:$0xf]
      %v354 = vld [vmem:[%s346 + $0x1c] sm:$0xf]
      %v355 = vld [vmem:[%s346 + $0x20] sm:$0xf]
      %v356 = vld [vmem:[%s346 + $0x24] sm:$0xf]
      %v357 = vld [vmem:[%s346 + $0x28] sm:$0xf]
      %v358 = vld [vmem:[%s346 + $0x2c] sm:$0xf]
      %v359 = vld [vmem:[%s346 + $0x30] sm:$0xf]
      %v360 = vld [vmem:[%s346 + $0x34] sm:$0xf]
      %v361 = vld [vmem:[%s346 + $0x38] sm:$0xf]
      %v362 = vld [vmem:[%s346 + $0x3c] sm:$0xf]
      %v365 = vunpack.c.l.b16 %v344
      %v366 = vunpack.c.l.b16 %v345
      %v367 = vpack.c.b16 %v186, %v365
      %v368 = vpack.c.b16 %v366, %v187
      %vm369 = vcmask 1044480
      %v370 = vrot.slane %v367, 3
      %v371 = vrot.slane %v368, 3
      %v372 = vsel %vm369, %v370, %v371
      %v391 = vunpack.c.l.b16 %v347
      %v392 = vunpack.c.l.b16 %v348
      %v393 = vunpack.c.l.b16 %v349
      %v394 = vunpack.c.l.b16 %v350
      %v395 = vunpack.c.l.b16 %v351
      %v396 = vunpack.c.l.b16 %v352
      %v397 = vunpack.c.l.b16 %v353
      %v398 = vunpack.c.l.b16 %v354
      %v399 = vunpack.c.l.b16 %v355
      %v400 = vunpack.c.l.b16 %v356
      %v401 = vunpack.c.l.b16 %v357
      %v402 = vunpack.c.l.b16 %v358
      %v403 = vunpack.c.l.b16 %v359
      %v404 = vunpack.c.l.b16 %v360
      %v405 = vunpack.c.l.b16 %v361
      %v406 = vunpack.c.l.b16 %v362
      %v407 = vpack.c.b16 %v392, %v391
      %v408 = vpack.c.b16 %v394, %v393
      %v409 = vpack.c.b16 %v396, %v395
      %v410 = vpack.c.b16 %v398, %v397
      %v411 = vpack.c.b16 %v400, %v399
      %v412 = vpack.c.b16 %v402, %v401
      %v413 = vpack.c.b16 %v404, %v403
      %v414 = vpack.c.b16 %v406, %v405
      %423 = vmatpush.bf16.msra.mxu0 %v414
      %424 = vmatpush.bf16.msra.mxu0 %v413
      %425 = vmatpush.bf16.msra.mxu0 %v412
      %426 = vmatpush.bf16.msra.mxu0 %v411
      %427 = vmatpush.bf16.msra.mxu0 %v410
      %428 = vmatpush.bf16.msra.mxu0 %v409
      %429 = vmatpush.bf16.msra.mxu0 %v408
      %430 = vmatpush.bf16.msra.mxu0 %v407
      %431 = vmatmul.bf16.gmra.mxu0 %v372
      %v432 = vpop.f32.mrf.mxu0
      %v433 = vadd.f32 0.0, %v432
      %v434 = vpop.f32.mrf.mxu0
      %v435 = vadd.f32 0.0, %v434
      %436 = vmatmul.bf16.gmra.mxu0 %v371
      %v437 = vpop.f32.mrf.mxu0
      %v438 = vadd.f32 0.0, %v437
      %v439 = vpop.f32.mrf.mxu0
      %440 = vdwg.mxu0
      %v441 = vadd.f32 %v336, %v433
      %v442 = vadd.f32 %v338, %v435
      %v443 = vadd.f32 %v341, %v438
      %v444 = vld [vmem:[%s138 + $0xc] sm:$0xf]
      %s445 = scalar_lea.vmem %s1, 192
      %v446 = vld [vmem:[%s445] sm:$0xf]
      %v447 = vld [vmem:[%s445 + $0x4] sm:$0xf]
      %v448 = vld [vmem:[%s445 + $0x8] sm:$0xf]
      %v449 = vld [vmem:[%s445 + $0xc] sm:$0xf]
      %v450 = vld [vmem:[%s445 + $0x10] sm:$0xf]
      %v451 = vld [vmem:[%s445 + $0x14] sm:$0xf]
      %v452 = vld [vmem:[%s445 + $0x18] sm:$0xf]
      %v453 = vld [vmem:[%s445 + $0x1c] sm:$0xf]
      %v454 = vld [vmem:[%s445 + $0x20] sm:$0xf]
      %v455 = vld [vmem:[%s445 + $0x24] sm:$0xf]
      %v456 = vld [vmem:[%s445 + $0x28] sm:$0xf]
      %v457 = vld [vmem:[%s445 + $0x2c] sm:$0xf]
      %v458 = vld [vmem:[%s445 + $0x30] sm:$0xf]
      %v459 = vld [vmem:[%s445 + $0x34] sm:$0xf]
      %v460 = vld [vmem:[%s445 + $0x38] sm:$0xf]
      %v461 = vld [vmem:[%s445 + $0x3c] sm:$0xf]
      %v463 = vunpack.c.l.b16 %v444
      %v464 = vpack.c.b16 %v463, %v187
      %vm465 = vsmask.f32 4352
      %v467 = vshrl.u32 %v367, 16
      %v469 = vrot.slane %v467, 3
      %v470 = vshll.u32 %v367, 16
      %v472 = vrot.slane %v470, 4
      %v473 = vor.u32 %v469, %v472
      %v475 = vshrl.u32 %v464, 16
      %v477 = vrot.slane %v475, 3
      %v478 = vshll.u32 %v464, 16
      %v480 = vrot.slane %v478, 4
      %v481 = vor.u32 %v477, %v480
      %v482 = vsel %vm465, %v473, %v481
      %v501 = vunpack.c.l.b16 %v446
      %v502 = vunpack.c.l.b16 %v447
      %v503 = vunpack.c.l.b16 %v448
      %v504 = vunpack.c.l.b16 %v449
      %v505 = vunpack.c.l.b16 %v450
      %v506 = vunpack.c.l.b16 %v451
      %v507 = vunpack.c.l.b16 %v452
      %v508 = vunpack.c.l.b16 %v453
      %v509 = vunpack.c.l.b16 %v454
      %v510 = vunpack.c.l.b16 %v455
      %v511 = vunpack.c.l.b16 %v456
      %v512 = vunpack.c.l.b16 %v457
      %v513 = vunpack.c.l.b16 %v458
      %v514 = vunpack.c.l.b16 %v459
      %v515 = vunpack.c.l.b16 %v460
      %v516 = vunpack.c.l.b16 %v461
      %v517 = vpack.c.b16 %v502, %v501
      %v518 = vpack.c.b16 %v504, %v503
      %v519 = vpack.c.b16 %v506, %v505
      %v520 = vpack.c.b16 %v508, %v507
      %v521 = vpack.c.b16 %v510, %v509
      %v522 = vpack.c.b16 %v512, %v511
      %v523 = vpack.c.b16 %v514, %v513
      %v524 = vpack.c.b16 %v516, %v515
      %533 = vmatpush.bf16.msra.mxu0 %v524
      %534 = vmatpush.bf16.msra.mxu0 %v523
      %535 = vmatpush.bf16.msra.mxu0 %v522
      %536 = vmatpush.bf16.msra.mxu0 %v521
      %537 = vmatpush.bf16.msra.mxu0 %v520
      %538 = vmatpush.bf16.msra.mxu0 %v519
      %539 = vmatpush.bf16.msra.mxu0 %v518
      %540 = vmatpush.bf16.msra.mxu0 %v517
      %541 = vmatmul.bf16.gmra.mxu0 %v482
      %v542 = vpop.f32.mrf.mxu0
      %v543 = vadd.f32 0.0, %v542
      %v544 = vpop.f32.mrf.mxu0
      %v545 = vadd.f32 0.0, %v544
      %546 = vmatmul.bf16.gmra.mxu0 %v481
      %v547 = vpop.f32.mrf.mxu0
      %v548 = vadd.f32 0.0, %v547
      %v549 = vpop.f32.mrf.mxu0
      %550 = vdwg.mxu0
      %v551 = vadd.f32 %v441, %v543
      %v552 = vadd.f32 %v442, %v545
      %v553 = vadd.f32 %v443, %v548
      %v554 = vpack.c.bf16 %v551, %v551
      %v555 = vpack.c.bf16 %v552, %v552
      %v556 = vpack.c.bf16 %v553, %v553
      %557 = vst [vmem:[%s143] sm:$0xf] %v554
      %558 = vst [vmem:[%s143 + $0x4] sm:$0xf] %v555
      %559 = vst [vmem:[%s143 + $0x8] sm:$0xf] %v556
      %p560 = scmp.lt.s32.totalorder %s13, 1
      %s561 = scalar_select %p560, %s13, 1
      %s562 = smul.addr %s561, 3
      %s563 = smul.addr %s562, 4
      %s564 = scalar_lea.vmem %s2, %s563
      // Predicated region
      $region29: #{_conv_t_s2_pallas_test.4} parent=27 // pred_check
        %p565 = pneg %p78
      $region30: #{_conv_t_s2_pallas_test.4} parent=27 // pred_check_branch
        %567 = sbr.rel (%p565) target = $region32
      $region31: #{_conv_t_s2_pallas_test.4} parent=27 // pred_region
        _
      $region32: #{_conv_t_s2_pallas_test.4} parent=27 // pred_fallthru
        _
    $region28: #{_conv_t_s2_pallas_test.4} parent=5 // pred_fallthru
      _
    %p568 = scmp.le.s32.totalorder 2, %s8
    // Predicated region
    $region33: #{_conv_t_s2_pallas_test.4} parent=5 // pred_check
      %p569 = pneg %p568
    $region34: #{_conv_t_s2_pallas_test.4} parent=5 // pred_check_branch
      %571 = sbr.rel (%p569) target = $region36
    $region35: #{_conv_t_s2_pallas_test.4} parent=5 // pred_region
      %s572 = ssub.s32 %s8, 2
      // Predicated region
      $region37: #{_conv_t_s2_pallas_test.4} parent=35 // pred_check
        %p573 = pneg %p84
      $region38: #{_conv_t_s2_pallas_test.4} parent=35 // pred_check_branch
        %575 = sbr.rel (%p573) target = $region40
      $region39: #{_conv_t_s2_pallas_test.4} parent=35 // pred_region
        %p576 = scmp.lt.s32.totalorder %s14, 1
        %s577 = scalar_select %p576, %s14, 1
        %s578 = smul.addr %s577, 3
        %s579 = smul.addr %s578, 4
        %s580 = scalar_lea.vmem %s2, %s579
      $region40: #{_conv_t_s2_pallas_test.4} parent=35 // pred_fallthru
        _
    $region36: #{_conv_t_s2_pallas_test.4} parent=5 // pred_fallthru
      _
  $region6: #{_conv_t_s2_pallas_test.4} parent=0 // loop_footer
    %s12 = sadd.s32 1, %s8
  $region7: #{_conv_t_s2_pallas_test.4} parent=0 // loop_footer_branch
    %7 = sbr.rel target = $region3
  $region8: #{_conv_t_s2_pallas_test.4} parent=0 // loop_exit
    _

// kernel: _conv_t_s2_pallas_test.6
$region0: #{_conv_t_s2_pallas_test.6}
  #allocation0 [shape = 'u32[]', space=smem, size = 0x4, offset = 0x4, fixed_abs, tag = 'smem constant byte address 0x4 - core index']
  #allocation1 [shape = 'u32[72,128]{1,0:T(1,128)}', space=vmem, size = 0x9000, scoped, tag = 'internal scratch']
  %s0 = inlined_call_operand.vmem [shape: bf16[2,40,128], index: 0, kind: input, shape index: {}]
  %s1 = inlined_call_operand.vmem [shape: bf16[4,128,128], index: 1, kind: input, shape index: {}]
  %s2 = inlined_call_operand.vmem [shape: bf16[2,24,128], index: 2, kind: output, shape index: {}]
  %s3 = sld [smem:[#allocation0]]
  $region41: #{_conv_t_s2_pallas_test.6} parent=0
    _
  %s5 = ssub.s32 1, %s3
  %s6 = scalar_select 0, %s5, %s3
  loop: start=0, step=1, limit=4
  $region2: #{_conv_t_s2_pallas_test.6} parent=0 // loop_pre_header
    _
  $region3: #{_conv_t_s2_pallas_test.6} parent=0 // loop_header
    %s8 = sphi 0, %s12
    %p9 = scmp.ge.s32.totalorder %s8, 4
    %s18 = sphi 0, %s20
    %s21 = sphi 0, %s18
    %s22 = sphi 0, %s21
    %s38 = sphi 0, %s22
    %s42 = sphi 0, %s42
    %s44 = sphi 0, %s42
    %s45 = sphi 0, %s44
    %s59 = sphi 0, %s45
    %s65 = sphi 0, %s67
    %s68 = sphi 0, %s65
    %s69 = sphi 0, %s68
    %s85 = sphi 0, %s69
  $region4: #{_conv_t_s2_pallas_test.6} parent=0 // loop_header_branch
    %11 = sbr.rel (%p9) target = $region8
  $region5: #{_conv_t_s2_pallas_test.6} parent=0 // loop_body
    %s13 = ssub.s32 %s8, 1
    %s14 = ssub.s32 %s8, 2
    %s15 = sadd.s32 %s8, 1
    %s16 = ssub.s32 %s8, %s15
    %p17 = scmp.eq.s32.totalorder %s16, 0
    %s19 = sadd.s32 %s18, 1
    %s20 = scalar_select %p17, %s18, %s19
    %p23 = pneg %p17
    %p24 = scmp.eq.s32.totalorder %s8, 1
    %p25 = por %p23, %p24
    %p26 = scmp.ne.s32.totalorder %s18, %s21
    %p27 = scmp.eq.s32.totalorder %s8, 0
    %p28 = por %p26, %p27
    %p29 = scmp.ne.s32.totalorder %s18, %s21
    %p30 = scmp.eq.s32.totalorder %s13, 1
    %p31 = por %p29, %p30
    %p32 = scmp.ne.s32.totalorder %s21, %s22
    %p33 = scmp.eq.s32.totalorder %s13, 0
    %p34 = por %p32, %p33
    %p35 = scmp.ne.s32.totalorder %s21, %s22
    %p36 = scmp.eq.s32.totalorder %s14, 1
    %p37 = por %p35, %p36
    %p39 = scmp.ne.s32.totalorder %s22, %s38
    %p40 = scmp.eq.s32.totalorder %s14, 0
    %p41 = por %p39, %p40
    %s43 = sadd.s32 %s42, 1
    %p46 = scmp.eq.s32.totalorder %s8, 1
    %p47 = scmp.ne.s32.totalorder %s42, %s44
    %p48 = scmp.eq.s32.totalorder %s8, 0
    %p49 = por %p47, %p48
    %p50 = scmp.ne.s32.totalorder %s42, %s44
    %p51 = scmp.eq.s32.totalorder %s13, 1
    %p52 = por %p50, %p51
    %p53 = scmp.ne.s32.totalorder %s44, %s45
    %p54 = scmp.eq.s32.totalorder %s13, 0
    %p55 = por %p53, %p54
    %p56 = scmp.ne.s32.totalorder %s44, %s45
    %p57 = scmp.eq.s32.totalorder %s14, 1
    %p58 = por %p56, %p57
    %p60 = scmp.ne.s32.totalorder %s45, %s59
    %p61 = scmp.eq.s32.totalorder %s14, 0
    %p62 = por %p60, %p61
    %s63 = ssub.s32 %s8, %s15
    %p64 = scmp.eq.s32.totalorder %s63, 0
    %s66 = sadd.s32 %s65, 1
    %s67 = scalar_select %p64, %s65, %s66
    %p70 = pneg %p64
    %p71 = scmp.eq.s32.totalorder %s8, 1
    %p72 = por %p70, %p71
    %p73 = scmp.ne.s32.totalorder %s65, %s68
    %p74 = scmp.eq.s32.totalorder %s8, 0
    %p75 = por %p73, %p74
    %p76 = scmp.ne.s32.totalorder %s65, %s68
    %p77 = scmp.eq.s32.totalorder %s13, 1
    %p78 = por %p76, %p77
    %p79 = scmp.ne.s32.totalorder %s68, %s69
    %p80 = scmp.eq.s32.totalorder %s13, 0
    %p81 = por %p79, %p80
    %p82 = scmp.ne.s32.totalorder %s68, %s69
    %p83 = scmp.eq.s32.totalorder %s14, 1
    %p84 = por %p82, %p83
    %p86 = scmp.ne.s32.totalorder %s69, %s85
    %p87 = scmp.eq.s32.totalorder %s14, 0
    %p88 = por %p86, %p87
    %p89 = scmp.le.s32.totalorder 1, %s8
    %p90 = scmp.lt.s32.totalorder %s8, 3
    %p91 = pnand %p89, %p90
    %p92 = pneg %p91
    // Predicated region
    $region9: #{_conv_t_s2_pallas_test.6} parent=5 // pred_check
      _
    $region10: #{_conv_t_s2_pallas_test.6} parent=5 // pred_check_branch
      %94 = sbr.rel (%p91) target = $region12
    $region11: #{_conv_t_s2_pallas_test.6} parent=5 // pred_region
      %s95 = ssub.s32 %s8, 1
      // Predicated region
      $region13: #{_conv_t_s2_pallas_test.6} parent=11 // pred_check
        %p96 = pneg %p55
      $region14: #{_conv_t_s2_pallas_test.6} parent=11 // pred_check_branch
        %98 = sbr.rel (%p96) target = $region16
      $region15: #{_conv_t_s2_pallas_test.6} parent=11 // pred_region
        _
      $region16: #{_conv_t_s2_pallas_test.6} parent=11 // pred_fallthru
        _
    $region12: #{_conv_t_s2_pallas_test.6} parent=5 // pred_fallthru
      _
    %p99 = scmp.lt.s32.totalorder %s8, 2
    // Predicated region
    $region17: #{_conv_t_s2_pallas_test.6} parent=5 // pred_check
      %p100 = pneg %p99
    $region18: #{_conv_t_s2_pallas_test.6} parent=5 // pred_check_branch
      %102 = sbr.rel (%p100) target = $region20
    $region19: #{_conv_t_s2_pallas_test.6} parent=5 // pred_region
      // Predicated region
      $region21: #{_conv_t_s2_pallas_test.6} parent=19 // pred_check
        %p103 = pneg %p28
      $region22: #{_conv_t_s2_pallas_test.6} parent=19 // pred_check_branch
        %105 = sbr.rel (%p103) target = $region24
      $region23: #{_conv_t_s2_pallas_test.6} parent=19 // pred_region
        %p106 = scmp.lt.s32.totalorder %s8, 1
        %s107 = scalar_select %p106, %s8, 1
        %s108 = smul.addr %s107, 5
        %s109 = smul.addr %s108, 4
        %s110 = scalar_lea.vmem %s0, %s109
      $region24: #{_conv_t_s2_pallas_test.6} parent=19 // pred_fallthru
        _
    $region20: #{_conv_t_s2_pallas_test.6} parent=5 // pred_fallthru
      _
    %p111 = scmp.le.s32.totalorder 1, %s8
    %p112 = scmp.lt.s32.totalorder %s8, 3
    %p113 = pnand %p111, %p112
    %p114 = pneg %p113
    // Predicated region
    $region25: #{_conv_t_s2_pallas_test.6} parent=5 // pred_check
      _
    $region26: #{_conv_t_s2_pallas_test.6} parent=5 // pred_check_branch
      %116 = sbr.rel (%p113) target = $region28
    $region27: #{_conv_t_s2_pallas_test.6} parent=5 // pred_region
      %s117 = ssub.s32 %s8, 1
      %p118 = scmp.lt.s32.totalorder %s13, 1
      %s119 = scalar_select %p118, %s13, 1
      %s120 = smul.addr %s119, 5
      %s121 = smul.addr %s120, 4
      %s122 = scalar_lea.vmem %s0, %s121
      %p123 = pneg %p34
      %p124 = pneg %p31
      %p125 = pneg %p55
      %p126 = pneg %p52
      %p127 = pneg %p81
      %p128 = pneg %p78
      %p129 = scmp.lt.s32.totalorder %s13, 1
      %s130 = scalar_select %p129, %s13, 1
      %s131 = smul.addr %s130, 3
      %s132 = smul.addr %s131, 4
      %s133 = scalar_lea.vmem %s2, %s132
      %p134 = scmp.lt.s32.totalorder %s13, 1
      %s135 = scalar_select %p134, %s13, 1
      %s136 = smul.addr %s135, 5
      %s137 = smul.addr %s136, 4
      %s138 = scalar_lea.vmem %s0, %s137
      %p139 = scmp.lt.s32.totalorder %s13, 1
      %s140 = scalar_select %p139, %s13, 1
      %s141 = smul.addr %s140, 3
      %s142 = smul.addr %s141, 4
      %s143 = scalar_lea.vmem %s2, %s142
      %v144 = vld [vmem:[%s138] sm:$0x8]
      %v145 = vld [vmem:[%s138 + $0x4] sm:$0xf]
      %v146 = vld [vmem:[%s138 + $0x8] sm:$0xf]
      %v147 = vld [vmem:[%s138 + $0xc] sm:$0x7]
      %v148 = vld [vmem:[%s1] sm:$0xf]
      %v149 = vld [vmem:[%s1 + $0x4] sm:$0xf]
      %v150 = vld [vmem:[%s1 + $0x8] sm:$0xf]
      %v151 = vld [vmem:[%s1 + $0xc] sm:$0xf]
      %v152 = vld [vmem:[%s1 + $0x10] sm:$0xf]
      %v153 = vld [vmem:[%s1 + $0x14] sm:$0xf]
      %v154 = vld [vmem:[%s1 + $0x18] sm:$0xf]
      %v155 = vld [vmem:[%s1 + $0x1c] sm:$0xf]
      %v156 = vld [vmem:[%s1 + $0x20] sm:$0xf]
      %v157 = vld [vmem:[%s1 + $0x24] sm:$0xf]
      %v158 = vld [vmem:[%s1 + $0x28] sm:$0xf]
      %v159 = vld [vmem:[%s1 + $0x2c] sm:$0xf]
      %v160 = vld [vmem:[%s1 + $0x30] sm:$0xf]
      %v161 = vld [vmem:[%s1 + $0x34] sm:$0xf]
      %v162 = vld [vmem:[%s1 + $0x38] sm:$0xf]
      %v163 = vld [vmem:[%s1 + $0x3c] sm:$0xf]
      %v164 = vld [vmem:[%s138 + $0xc] sm:$0xf]
      %s165 = scalar_lea.vmem %s1, 64
      %v166 = vld [vmem:[%s165] sm:$0xf]
      %v167 = vld [vmem:[%s165 + $0x4] sm:$0xf]
      %v168 = vld [vmem:[%s165 + $0x8] sm:$0xf]
      %v169 = vld [vmem:[%s165 + $0xc] sm:$0xf]
      %v170 = vld [vmem:[%s165 + $0x10] sm:$0xf]
      %v171 = vld [vmem:[%s165 + $0x14] sm:$0xf]
      %v172 = vld [vmem:[%s165 + $0x18] sm:$0xf]
      %v173 = vld [vmem:[%s165 + $0x1c] sm:$0xf]
      %v174 = vld [vmem:[%s165 + $0x20] sm:$0xf]
      %v175 = vld [vmem:[%s165 + $0x24] sm:$0xf]
      %v176 = vld [vmem:[%s165 + $0x28] sm:$0xf]
      %v177 = vld [vmem:[%s165 + $0x2c] sm:$0xf]
      %v178 = vld [vmem:[%s165 + $0x30] sm:$0xf]
      %v179 = vld [vmem:[%s165 + $0x34] sm:$0xf]
      %v180 = vld [vmem:[%s165 + $0x38] sm:$0xf]
      %v181 = vld [vmem:[%s165 + $0x3c] sm:$0xf]
      %v186 = vunpack.c.l.b16 %v144
      %v187 = vunpack.c.l.b16 %v145
      %v188 = vunpack.c.l.b16 %v146
      %v189 = vunpack.c.l.b16 %v164
      %v190 = vpack.c.b16 %v187, %v186
      %v191 = vpack.c.b16 %v189, %v188
      %vm192 = vsmask.f32 4352
      %v194 = vshrl.u32 %v190, 16
      %v196 = vrot.slane %v194, 3
      %v197 = vshll.u32 %v190, 16
      %v199 = vrot.slane %v197, 4
      %v200 = vor.u32 %v196, %v199
      %v202 = vshrl.u32 %v191, 16
      %v204 = vrot.slane %v202, 3
      %v205 = vshll.u32 %v191, 16
      %v207 = vrot.slane %v205, 4
      %v208 = vor.u32 %v204, %v207
      %v209 = vsel %vm192, %v200, %v208
      %v228 = vunpack.c.l.b16 %v166
      %v229 = vunpack.c.l.b16 %v167
      %v230 = vunpack.c.l.b16 %v168
      %v231 = vunpack.c.l.b16 %v169
      %v232 = vunpack.c.l.b16 %v170
      %v233 = vunpack.c.l.b16 %v171
      %v234 = vunpack.c.l.b16 %v172
      %v235 = vunpack.c.l.b16 %v173
      %v236 = vunpack.c.l.b16 %v174
      %v237 = vunpack.c.l.b16 %v175
      %v238 = vunpack.c.l.b16 %v176
      %v239 = vunpack.c.l.b16 %v177
      %v240 = vunpack.c.l.b16 %v178
      %v241 = vunpack.c.l.b16 %v179
      %v242 = vunpack.c.l.b16 %v180
      %v243 = vunpack.c.l.b16 %v181
      %v244 = vpack.c.b16 %v229, %v228
      %v245 = vpack.c.b16 %v231, %v230
      %v246 = vpack.c.b16 %v233, %v232
      %v247 = vpack.c.b16 %v235, %v234
      %v248 = vpack.c.b16 %v237, %v236
      %v249 = vpack.c.b16 %v239, %v238
      %v250 = vpack.c.b16 %v241, %v240
      %v251 = vpack.c.b16 %v243, %v242
      %260 = vmatpush.bf16.msra.mxu0 %v251
      %261 = vmatpush.bf16.msra.mxu0 %v250
      %262 = vmatpush.bf16.msra.mxu0 %v249
      %263 = vmatpush.bf16.msra.mxu0 %v248
      %264 = vmatpush.bf16.msra.mxu0 %v247
      %265 = vmatpush.bf16.msra.mxu0 %v246
      %266 = vmatpush.bf16.msra.mxu0 %v245
      %267 = vmatpush.bf16.msra.mxu0 %v244
      %268 = vmatmul.bf16.gmra.mxu0 %v209
      %v269 = vpop.f32.mrf.mxu0
      %v270 = vadd.f32 0.0, %v269
      %v271 = vpop.f32.mrf.mxu0
      %v272 = vadd.f32 0.0, %v271
      %273 = vmatmul.bf16.gmra.mxu0 %v208
      %v274 = vpop.f32.mrf.mxu0
      %v275 = vadd.f32 0.0, %v274
      %v276 = vpop.f32.mrf.mxu0
      %277 = vdwg.mxu0
      %v279 = vunpack.c.l.b16 %v147
      %v280 = vpack.c.b16 %v279, %v188
      %vm281 = vcmask 1044480
      %v282 = vrot.slane %v190, 3
      %v283 = vrot.slane %v280, 3
      %v284 = vsel %vm281, %v282, %v283
      %v303 = vunpack.c.l.b16 %v148
      %v304 = vunpack.c.l.b16 %v149
      %v305 = vunpack.c.l.b16 %v150
      %v306 = vunpack.c.l.b16 %v151
      %v307 = vunpack.c.l.b16 %v152
      %v308 = vunpack.c.l.b16 %v153
      %v309 = vunpack.c.l.b16 %v154
      %v310 = vunpack.c.l.b16 %v155
      %v311 = vunpack.c.l.b16 %v156
      %v312 = vunpack.c.l.b16 %v157
      %v313 = vunpack.c.l.b16 %v158
      %v314 = vunpack.c.l.b16 %v159
      %v315 = vunpack.c.l.b16 %v160
      %v316 = vunpack.c.l.b16 %v161
      %v317 = vunpack.c.l.b16 %v162
      %v318 = vunpack.c.l.b16 %v163
      %v319 = vpack.c.b16 %v304, %v303
      %v320 = vpack.c.b16 %v306, %v305
      %v321 = vpack.c.b16 %v308, %v307
      %v322 = vpack.c.b16 %v310, %v309
      %v323 = vpack.c.b16 %v312, %v311
      %v324 = vpack.c.b16 %v314, %v313
      %v325 = vpack.c.b16 %v316, %v315
      %v326 = vpack.c.b16 %v318, %v317
      %335 = vmatpush.bf16.msra.mxu0 %v326
      %336 = vmatpush.bf16.msra.mxu0 %v325
      %337 = vmatpush.bf16.msra.mxu0 %v324
      %338 = vmatpush.bf16.msra.mxu0 %v323
      %339 = vmatpush.bf16.msra.mxu0 %v322
      %340 = vmatpush.bf16.msra.mxu0 %v321
      %341 = vmatpush.bf16.msra.mxu0 %v320
      %342 = vmatpush.bf16.msra.mxu0 %v319
      %343 = vmatmul.bf16.gmra.mxu0 %v284
      %v344 = vpop.f32.mrf.mxu0
      %v345 = vadd.f32 %v270, %v344
      %v346 = vpop.f32.mrf.mxu0
      %v347 = vadd.f32 %v272, %v346
      %348 = vmatmul.bf16.gmra.mxu0 %v283
      %v349 = vpop.f32.mrf.mxu0
      %v350 = vadd.f32 %v275, %v349
      %v351 = vpop.f32.mrf.mxu0
      %352 = vdwg.mxu0
      %v353 = vld [vmem:[%s138 + $0x4] sm:$0xc]
      %v354 = vld [vmem:[%s138 + $0x8] sm:$0xf]
      %v355 = vld [vmem:[%s138 + $0xc] sm:$0xf]
      %v356 = vld [vmem:[%s138 + $0x10] sm:$0x3]
      %s357 = scalar_lea.vmem %s1, 128
      %v358 = vld [vmem:[%s357] sm:$0xf]
      %v359 = vld [vmem:[%s357 + $0x4] sm:$0xf]
      %v360 = vld [vmem:[%s357 + $0x8] sm:$0xf]
      %v361 = vld [vmem:[%s357 + $0xc] sm:$0xf]
      %v362 = vld [vmem:[%s357 + $0x10] sm:$0xf]
      %v363 = vld [vmem:[%s357 + $0x14] sm:$0xf]
      %v364 = vld [vmem:[%s357 + $0x18] sm:$0xf]
      %v365 = vld [vmem:[%s357 + $0x1c] sm:$0xf]
      %v366 = vld [vmem:[%s357 + $0x20] sm:$0xf]
      %v367 = vld [vmem:[%s357 + $0x24] sm:$0xf]
      %v368 = vld [vmem:[%s357 + $0x28] sm:$0xf]
      %v369 = vld [vmem:[%s357 + $0x2c] sm:$0xf]
      %v370 = vld [vmem:[%s357 + $0x30] sm:$0xf]
      %v371 = vld [vmem:[%s357 + $0x34] sm:$0xf]
      %v372 = vld [vmem:[%s357 + $0x38] sm:$0xf]
      %v373 = vld [vmem:[%s357 + $0x3c] sm:$0xf]
      %v378 = vunpack.c.l.b16 %v353
      %v379 = vunpack.c.l.b16 %v354
      %v380 = vunpack.c.l.b16 %v355
      %v381 = vunpack.c.l.b16 %v356
      %v382 = vpack.c.b16 %v379, %v378
      %v383 = vpack.c.b16 %v381, %v380
      %vm384 = vcmask 1045504
      %v385 = vrot.slane %v382, 2
      %v386 = vrot.slane %v383, 2
      %v387 = vsel %vm384, %v385, %v386
      %v406 = vunpack.c.l.b16 %v358
      %v407 = vunpack.c.l.b16 %v359
      %v408 = vunpack.c.l.b16 %v360
      %v409 = vunpack.c.l.b16 %v361
      %v410 = vunpack.c.l.b16 %v362
      %v411 = vunpack.c.l.b16 %v363
      %v412 = vunpack.c.l.b16 %v364
      %v413 = vunpack.c.l.b16 %v365
      %v414 = vunpack.c.l.b16 %v366
      %v415 = vunpack.c.l.b16 %v367
      %v416 = vunpack.c.l.b16 %v368
      %v417 = vunpack.c.l.b16 %v369
      %v418 = vunpack.c.l.b16 %v370
      %v419 = vunpack.c.l.b16 %v371
      %v420 = vunpack.c.l.b16 %v372
      %v421 = vunpack.c.l.b16 %v373
      %v422 = vpack.c.b16 %v407, %v406
      %v423 = vpack.c.b16 %v409, %v408
      %v424 = vpack.c.b16 %v411, %v410
      %v425 = vpack.c.b16 %v413, %v412
      %v426 = vpack.c.b16 %v415, %v414
      %v427 = vpack.c.b16 %v417, %v416
      %v428 = vpack.c.b16 %v419, %v418
      %v429 = vpack.c.b16 %v421, %v420
      %438 = vmatpush.bf16.msra.mxu0 %v429
      %439 = vmatpush.bf16.msra.mxu0 %v428
      %440 = vmatpush.bf16.msra.mxu0 %v427
      %441 = vmatpush.bf16.msra.mxu0 %v426
      %442 = vmatpush.bf16.msra.mxu0 %v425
      %443 = vmatpush.bf16.msra.mxu0 %v424
      %444 = vmatpush.bf16.msra.mxu0 %v423
      %445 = vmatpush.bf16.msra.mxu0 %v422
      %446 = vmatmul.bf16.gmra.mxu0 %v387
      %v447 = vpop.f32.mrf.mxu0
      %v448 = vadd.f32 0.0, %v447
      %v449 = vpop.f32.mrf.mxu0
      %v450 = vadd.f32 0.0, %v449
      %451 = vmatmul.bf16.gmra.mxu0 %v386
      %v452 = vpop.f32.mrf.mxu0
      %v453 = vadd.f32 0.0, %v452
      %v454 = vpop.f32.mrf.mxu0
      %455 = vdwg.mxu0
      %v456 = vadd.f32 %v345, %v448
      %v457 = vadd.f32 %v347, %v450
      %v458 = vadd.f32 %v350, %v453
      %v459 = vld [vmem:[%s138 + $0x10] sm:$0x7]
      %s460 = scalar_lea.vmem %s1, 192
      %v461 = vld [vmem:[%s460] sm:$0xf]
      %v462 = vld [vmem:[%s460 + $0x4] sm:$0xf]
      %v463 = vld [vmem:[%s460 + $0x8] sm:$0xf]
      %v464 = vld [vmem:[%s460 + $0xc] sm:$0xf]
      %v465 = vld [vmem:[%s460 + $0x10] sm:$0xf]
      %v466 = vld [vmem:[%s460 + $0x14] sm:$0xf]
      %v467 = vld [vmem:[%s460 + $0x18] sm:$0xf]
      %v468 = vld [vmem:[%s460 + $0x1c] sm:$0xf]
      %v469 = vld [vmem:[%s460 + $0x20] sm:$0xf]
      %v470 = vld [vmem:[%s460 + $0x24] sm:$0xf]
      %v471 = vld [vmem:[%s460 + $0x28] sm:$0xf]
      %v472 = vld [vmem:[%s460 + $0x2c] sm:$0xf]
      %v473 = vld [vmem:[%s460 + $0x30] sm:$0xf]
      %v474 = vld [vmem:[%s460 + $0x34] sm:$0xf]
      %v475 = vld [vmem:[%s460 + $0x38] sm:$0xf]
      %v476 = vld [vmem:[%s460 + $0x3c] sm:$0xf]
      %v478 = vunpack.c.l.b16 %v459
      %v479 = vpack.c.b16 %v478, %v380
      %vm480 = vsmask.f32 5376
      %v482 = vshrl.u32 %v382, 16
      %v484 = vrot.slane %v482, 2
      %v485 = vshll.u32 %v382, 16
      %v487 = vrot.slane %v485, 3
      %v488 = vor.u32 %v484, %v487
      %v490 = vshrl.u32 %v479, 16
      %v492 = vrot.slane %v490, 2
      %v493 = vshll.u32 %v479, 16
      %v495 = vrot.slane %v493, 3
      %v496 = vor.u32 %v492, %v495
      %v497 = vsel %vm480, %v488, %v496
      %v516 = vunpack.c.l.b16 %v461
      %v517 = vunpack.c.l.b16 %v462
      %v518 = vunpack.c.l.b16 %v463
      %v519 = vunpack.c.l.b16 %v464
      %v520 = vunpack.c.l.b16 %v465
      %v521 = vunpack.c.l.b16 %v466
      %v522 = vunpack.c.l.b16 %v467
      %v523 = vunpack.c.l.b16 %v468
      %v524 = vunpack.c.l.b16 %v469
      %v525 = vunpack.c.l.b16 %v470
      %v526 = vunpack.c.l.b16 %v471
      %v527 = vunpack.c.l.b16 %v472
      %v528 = vunpack.c.l.b16 %v473
      %v529 = vunpack.c.l.b16 %v474
      %v530 = vunpack.c.l.b16 %v475
      %v531 = vunpack.c.l.b16 %v476
      %v532 = vpack.c.b16 %v517, %v516
      %v533 = vpack.c.b16 %v519, %v518
      %v534 = vpack.c.b16 %v521, %v520
      %v535 = vpack.c.b16 %v523, %v522
      %v536 = vpack.c.b16 %v525, %v524
      %v537 = vpack.c.b16 %v527, %v526
      %v538 = vpack.c.b16 %v529, %v528
      %v539 = vpack.c.b16 %v531, %v530
      %548 = vmatpush.bf16.msra.mxu0 %v539
      %549 = vmatpush.bf16.msra.mxu0 %v538
      %550 = vmatpush.bf16.msra.mxu0 %v537
      %551 = vmatpush.bf16.msra.mxu0 %v536
      %552 = vmatpush.bf16.msra.mxu0 %v535
      %553 = vmatpush.bf16.msra.mxu0 %v534
      %554 = vmatpush.bf16.msra.mxu0 %v533
      %555 = vmatpush.bf16.msra.mxu0 %v532
      %556 = vmatmul.bf16.gmra.mxu0 %v497
      %v557 = vpop.f32.mrf.mxu0
      %v558 = vadd.f32 0.0, %v557
      %v559 = vpop.f32.mrf.mxu0
      %v560 = vadd.f32 0.0, %v559
      %561 = vmatmul.bf16.gmra.mxu0 %v496
      %v562 = vpop.f32.mrf.mxu0
      %v563 = vadd.f32 0.0, %v562
      %v564 = vpop.f32.mrf.mxu0
      %565 = vdwg.mxu0
      %v566 = vadd.f32 %v456, %v558
      %v567 = vadd.f32 %v457, %v560
      %v568 = vadd.f32 %v458, %v563
      %v569 = vpack.c.bf16 %v566, %v566
      %v570 = vpack.c.bf16 %v567, %v567
      %v571 = vpack.c.bf16 %v568, %v568
      %572 = vst [vmem:[%s143] sm:$0xf] %v569
      %573 = vst [vmem:[%s143 + $0x4] sm:$0xf] %v570
      %574 = vst [vmem:[%s143 + $0x8] sm:$0xf] %v571
      %p575 = scmp.lt.s32.totalorder %s13, 1
      %s576 = scalar_select %p575, %s13, 1
      %s577 = smul.addr %s576, 3
      %s578 = smul.addr %s577, 4
      %s579 = scalar_lea.vmem %s2, %s578
      // Predicated region
      $region29: #{_conv_t_s2_pallas_test.6} parent=27 // pred_check
        %p580 = pneg %p78
      $region30: #{_conv_t_s2_pallas_test.6} parent=27 // pred_check_branch
        %582 = sbr.rel (%p580) target = $region32
      $region31: #{_conv_t_s2_pallas_test.6} parent=27 // pred_region
        _
      $region32: #{_conv_t_s2_pallas_test.6} parent=27 // pred_fallthru
        _
    $region28: #{_conv_t_s2_pallas_test.6} parent=5 // pred_fallthru
      _
    %p583 = scmp.le.s32.totalorder 2, %s8
    // Predicated region
    $region33: #{_conv_t_s2_pallas_test.6} parent=5 // pred_check
      %p584 = pneg %p583
    $region34: #{_conv_t_s2_pallas_test.6} parent=5 // pred_check_branch
      %586 = sbr.rel (%p584) target = $region36
    $region35: #{_conv_t_s2_pallas_test.6} parent=5 // pred_region
      %s587 = ssub.s32 %s8, 2
      // Predicated region
      $region37: #{_conv_t_s2_pallas_test.6} parent=35 // pred_check
        %p588 = pneg %p84
      $region38: #{_conv_t_s2_pallas_test.6} parent=35 // pred_check_branch
        %590 = sbr.rel (%p588) target = $region40
      $region39: #{_conv_t_s2_pallas_test.6} parent=35 // pred_region
        %p591 = scmp.lt.s32.totalorder %s14, 1
        %s592 = scalar_select %p591, %s14, 1
        %s593 = smul.addr %s592, 3
        %s594 = smul.addr %s593, 4
        %s595 = scalar_lea.vmem %s2, %s594
      $region40: #{_conv_t_s2_pallas_test.6} parent=35 // pred_fallthru
        _
    $region36: #{_conv_t_s2_pallas_test.6} parent=5 // pred_fallthru
      _
  $region6: #{_conv_t_s2_pallas_test.6} parent=0 // loop_footer
    %s12 = sadd.s32 1, %s8
  $region7: #{_conv_t_s2_pallas_test.6} parent=0 // loop_footer_branch
    %7 = sbr.rel target = $region3
  $region8: #{_conv_t_s2_pallas_test.6} parent=0 // loop_exit
    _

// kernel: _conv_t_s2_pallas_test.7
$region0: #{_conv_t_s2_pallas_test.7}
  #allocation0 [shape = 'u32[]', space=smem, size = 0x4, offset = 0x4, fixed_abs, tag = 'smem constant byte address 0x4 - core index']
  #allocation1 [shape = 'u32[72,128]{1,0:T(1,128)}', space=vmem, size = 0x9000, scoped, tag = 'internal scratch']
  %s0 = inlined_call_operand.vmem [shape: bf16[2,40,128], index: 0, kind: input, shape index: {}]
  %s1 = inlined_call_operand.vmem [shape: bf16[4,128,128], index: 1, kind: input, shape index: {}]
  %s2 = inlined_call_operand.vmem [shape: bf16[2,24,128], index: 2, kind: output, shape index: {}]
  %s3 = sld [smem:[#allocation0]]
  $region41: #{_conv_t_s2_pallas_test.7} parent=0
    _
  %s5 = ssub.s32 1, %s3
  %s6 = scalar_select 0, %s5, %s3
  loop: start=0, step=1, limit=4
  $region2: #{_conv_t_s2_pallas_test.7} parent=0 // loop_pre_header
    _
  $region3: #{_conv_t_s2_pallas_test.7} parent=0 // loop_header
    %s8 = sphi 0, %s12
    %p9 = scmp.ge.s32.totalorder %s8, 4
    %s18 = sphi 0, %s20
    %s21 = sphi 0, %s18
    %s22 = sphi 0, %s21
    %s38 = sphi 0, %s22
    %s42 = sphi 0, %s42
    %s44 = sphi 0, %s42
    %s45 = sphi 0, %s44
    %s59 = sphi 0, %s45
    %s65 = sphi 0, %s67
    %s68 = sphi 0, %s65
    %s69 = sphi 0, %s68
    %s85 = sphi 0, %s69
  $region4: #{_conv_t_s2_pallas_test.7} parent=0 // loop_header_branch
    %11 = sbr.rel (%p9) target = $region8
  $region5: #{_conv_t_s2_pallas_test.7} parent=0 // loop_body
    %s13 = ssub.s32 %s8, 1
    %s14 = ssub.s32 %s8, 2
    %s15 = sadd.s32 %s8, 1
    %s16 = ssub.s32 %s8, %s15
    %p17 = scmp.eq.s32.totalorder %s16, 0
    %s19 = sadd.s32 %s18, 1
    %s20 = scalar_select %p17, %s18, %s19
    %p23 = pneg %p17
    %p24 = scmp.eq.s32.totalorder %s8, 1
    %p25 = por %p23, %p24
    %p26 = scmp.ne.s32.totalorder %s18, %s21
    %p27 = scmp.eq.s32.totalorder %s8, 0
    %p28 = por %p26, %p27
    %p29 = scmp.ne.s32.totalorder %s18, %s21
    %p30 = scmp.eq.s32.totalorder %s13, 1
    %p31 = por %p29, %p30
    %p32 = scmp.ne.s32.totalorder %s21, %s22
    %p33 = scmp.eq.s32.totalorder %s13, 0
    %p34 = por %p32, %p33
    %p35 = scmp.ne.s32.totalorder %s21, %s22
    %p36 = scmp.eq.s32.totalorder %s14, 1
    %p37 = por %p35, %p36
    %p39 = scmp.ne.s32.totalorder %s22, %s38
    %p40 = scmp.eq.s32.totalorder %s14, 0
    %p41 = por %p39, %p40
    %s43 = sadd.s32 %s42, 1
    %p46 = scmp.eq.s32.totalorder %s8, 1
    %p47 = scmp.ne.s32.totalorder %s42, %s44
    %p48 = scmp.eq.s32.totalorder %s8, 0
    %p49 = por %p47, %p48
    %p50 = scmp.ne.s32.totalorder %s42, %s44
    %p51 = scmp.eq.s32.totalorder %s13, 1
    %p52 = por %p50, %p51
    %p53 = scmp.ne.s32.totalorder %s44, %s45
    %p54 = scmp.eq.s32.totalorder %s13, 0
    %p55 = por %p53, %p54
    %p56 = scmp.ne.s32.totalorder %s44, %s45
    %p57 = scmp.eq.s32.totalorder %s14, 1
    %p58 = por %p56, %p57
    %p60 = scmp.ne.s32.totalorder %s45, %s59
    %p61 = scmp.eq.s32.totalorder %s14, 0
    %p62 = por %p60, %p61
    %s63 = ssub.s32 %s8, %s15
    %p64 = scmp.eq.s32.totalorder %s63, 0
    %s66 = sadd.s32 %s65, 1
    %s67 = scalar_select %p64, %s65, %s66
    %p70 = pneg %p64
    %p71 = scmp.eq.s32.totalorder %s8, 1
    %p72 = por %p70, %p71
    %p73 = scmp.ne.s32.totalorder %s65, %s68
    %p74 = scmp.eq.s32.totalorder %s8, 0
    %p75 = por %p73, %p74
    %p76 = scmp.ne.s32.totalorder %s65, %s68
    %p77 = scmp.eq.s32.totalorder %s13, 1
    %p78 = por %p76, %p77
    %p79 = scmp.ne.s32.totalorder %s68, %s69
    %p80 = scmp.eq.s32.totalorder %s13, 0
    %p81 = por %p79, %p80
    %p82 = scmp.ne.s32.totalorder %s68, %s69
    %p83 = scmp.eq.s32.totalorder %s14, 1
    %p84 = por %p82, %p83
    %p86 = scmp.ne.s32.totalorder %s69, %s85
    %p87 = scmp.eq.s32.totalorder %s14, 0
    %p88 = por %p86, %p87
    %p89 = scmp.le.s32.totalorder 1, %s8
    %p90 = scmp.lt.s32.totalorder %s8, 3
    %p91 = pnand %p89, %p90
    %p92 = pneg %p91
    // Predicated region
    $region9: #{_conv_t_s2_pallas_test.7} parent=5 // pred_check
      _
    $region10: #{_conv_t_s2_pallas_test.7} parent=5 // pred_check_branch
      %94 = sbr.rel (%p91) target = $region12
    $region11: #{_conv_t_s2_pallas_test.7} parent=5 // pred_region
      %s95 = ssub.s32 %s8, 1
      // Predicated region
      $region13: #{_conv_t_s2_pallas_test.7} parent=11 // pred_check
        %p96 = pneg %p55
      $region14: #{_conv_t_s2_pallas_test.7} parent=11 // pred_check_branch
        %98 = sbr.rel (%p96) target = $region16
      $region15: #{_conv_t_s2_pallas_test.7} parent=11 // pred_region
        _
      $region16: #{_conv_t_s2_pallas_test.7} parent=11 // pred_fallthru
        _
    $region12: #{_conv_t_s2_pallas_test.7} parent=5 // pred_fallthru
      _
    %p99 = scmp.lt.s32.totalorder %s8, 2
    // Predicated region
    $region17: #{_conv_t_s2_pallas_test.7} parent=5 // pred_check
      %p100 = pneg %p99
    $region18: #{_conv_t_s2_pallas_test.7} parent=5 // pred_check_branch
      %102 = sbr.rel (%p100) target = $region20
    $region19: #{_conv_t_s2_pallas_test.7} parent=5 // pred_region
      // Predicated region
      $region21: #{_conv_t_s2_pallas_test.7} parent=19 // pred_check
        %p103 = pneg %p28
      $region22: #{_conv_t_s2_pallas_test.7} parent=19 // pred_check_branch
        %105 = sbr.rel (%p103) target = $region24
      $region23: #{_conv_t_s2_pallas_test.7} parent=19 // pred_region
        %p106 = scmp.lt.s32.totalorder %s8, 1
        %s107 = scalar_select %p106, %s8, 1
        %s108 = smul.addr %s107, 5
        %s109 = smul.addr %s108, 4
        %s110 = scalar_lea.vmem %s0, %s109
      $region24: #{_conv_t_s2_pallas_test.7} parent=19 // pred_fallthru
        _
    $region20: #{_conv_t_s2_pallas_test.7} parent=5 // pred_fallthru
      _
    %p111 = scmp.le.s32.totalorder 1, %s8
    %p112 = scmp.lt.s32.totalorder %s8, 3
    %p113 = pnand %p111, %p112
    %p114 = pneg %p113
    // Predicated region
    $region25: #{_conv_t_s2_pallas_test.7} parent=5 // pred_check
      _
    $region26: #{_conv_t_s2_pallas_test.7} parent=5 // pred_check_branch
      %116 = sbr.rel (%p113) target = $region28
    $region27: #{_conv_t_s2_pallas_test.7} parent=5 // pred_region
      %s117 = ssub.s32 %s8, 1
      %p118 = scmp.lt.s32.totalorder %s13, 1
      %s119 = scalar_select %p118, %s13, 1
      %s120 = smul.addr %s119, 5
      %s121 = smul.addr %s120, 4
      %s122 = scalar_lea.vmem %s0, %s121
      %p123 = pneg %p34
      %p124 = pneg %p31
      %p125 = pneg %p55
      %p126 = pneg %p52
      %p127 = pneg %p81
      %p128 = pneg %p78
      %p129 = scmp.lt.s32.totalorder %s13, 1
      %s130 = scalar_select %p129, %s13, 1
      %s131 = smul.addr %s130, 3
      %s132 = smul.addr %s131, 4
      %s133 = scalar_lea.vmem %s2, %s132
      %p134 = scmp.lt.s32.totalorder %s13, 1
      %s135 = scalar_select %p134, %s13, 1
      %s136 = smul.addr %s135, 5
      %s137 = smul.addr %s136, 4
      %s138 = scalar_lea.vmem %s0, %s137
      %p139 = scmp.lt.s32.totalorder %s13, 1
      %s140 = scalar_select %p139, %s13, 1
      %s141 = smul.addr %s140, 3
      %s142 = smul.addr %s141, 4
      %s143 = scalar_lea.vmem %s2, %s142
      %v144 = vld [vmem:[%s138] sm:$0x8]
      %v145 = vld [vmem:[%s138 + $0x4] sm:$0xf]
      %v146 = vld [vmem:[%s138 + $0x8] sm:$0xf]
      %v147 = vld [vmem:[%s138 + $0xc] sm:$0xf]
      %v148 = vld [vmem:[%s1] sm:$0xf]
      %v149 = vld [vmem:[%s1 + $0x4] sm:$0xf]
      %v150 = vld [vmem:[%s1 + $0x8] sm:$0xf]
      %v151 = vld [vmem:[%s1 + $0xc] sm:$0xf]
      %v152 = vld [vmem:[%s1 + $0x10] sm:$0xf]
      %v153 = vld [vmem:[%s1 + $0x14] sm:$0xf]
      %v154 = vld [vmem:[%s1 + $0x18] sm:$0xf]
      %v155 = vld [vmem:[%s1 + $0x1c] sm:$0xf]
      %v156 = vld [vmem:[%s1 + $0x20] sm:$0xf]
      %v157 = vld [vmem:[%s1 + $0x24] sm:$0xf]
      %v158 = vld [vmem:[%s1 + $0x28] sm:$0xf]
      %v159 = vld [vmem:[%s1 + $0x2c] sm:$0xf]
      %v160 = vld [vmem:[%s1 + $0x30] sm:$0xf]
      %v161 = vld [vmem:[%s1 + $0x34] sm:$0xf]
      %v162 = vld [vmem:[%s1 + $0x38] sm:$0xf]
      %v163 = vld [vmem:[%s1 + $0x3c] sm:$0xf]
      %s164 = scalar_lea.vmem %s1, 64
      %v165 = vld [vmem:[%s164] sm:$0xf]
      %v166 = vld [vmem:[%s164 + $0x4] sm:$0xf]
      %v167 = vld [vmem:[%s164 + $0x8] sm:$0xf]
      %v168 = vld [vmem:[%s164 + $0xc] sm:$0xf]
      %v169 = vld [vmem:[%s164 + $0x10] sm:$0xf]
      %v170 = vld [vmem:[%s164 + $0x14] sm:$0xf]
      %v171 = vld [vmem:[%s164 + $0x18] sm:$0xf]
      %v172 = vld [vmem:[%s164 + $0x1c] sm:$0xf]
      %v173 = vld [vmem:[%s164 + $0x20] sm:$0xf]
      %v174 = vld [vmem:[%s164 + $0x24] sm:$0xf]
      %v175 = vld [vmem:[%s164 + $0x28] sm:$0xf]
      %v176 = vld [vmem:[%s164 + $0x2c] sm:$0xf]
      %v177 = vld [vmem:[%s164 + $0x30] sm:$0xf]
      %v178 = vld [vmem:[%s164 + $0x34] sm:$0xf]
      %v179 = vld [vmem:[%s164 + $0x38] sm:$0xf]
      %v180 = vld [vmem:[%s164 + $0x3c] sm:$0xf]
      %v184 = vunpack.c.l.b16 %v145
      %v185 = vunpack.c.l.b16 %v146
      %v186 = vunpack.c.l.b16 %v147
      %v187 = vpack.c.b16 %v185, %v184
      %v188 = vpack.c.b16 %v186, %v186
      %v207 = vunpack.c.l.b16 %v165
      %v208 = vunpack.c.l.b16 %v166
      %v209 = vunpack.c.l.b16 %v167
      %v210 = vunpack.c.l.b16 %v168
      %v211 = vunpack.c.l.b16 %v169
      %v212 = vunpack.c.l.b16 %v170
      %v213 = vunpack.c.l.b16 %v171
      %v214 = vunpack.c.l.b16 %v172
      %v215 = vunpack.c.l.b16 %v173
      %v216 = vunpack.c.l.b16 %v174
      %v217 = vunpack.c.l.b16 %v175
      %v218 = vunpack.c.l.b16 %v176
      %v219 = vunpack.c.l.b16 %v177
      %v220 = vunpack.c.l.b16 %v178
      %v221 = vunpack.c.l.b16 %v179
      %v222 = vunpack.c.l.b16 %v180
      %v223 = vpack.c.b16 %v208, %v207
      %v224 = vpack.c.b16 %v210, %v209
      %v225 = vpack.c.b16 %v212, %v211
      %v226 = vpack.c.b16 %v214, %v213
      %v227 = vpack.c.b16 %v216, %v215
      %v228 = vpack.c.b16 %v218, %v217
      %v229 = vpack.c.b16 %v220, %v219
      %v230 = vpack.c.b16 %v222, %v221
      %239 = vmatpush.bf16.msra.mxu0 %v230
      %240 = vmatpush.bf16.msra.mxu0 %v229
      %241 = vmatpush.bf16.msra.mxu0 %v228
      %242 = vmatpush.bf16.msra.mxu0 %v227
      %243 = vmatpush.bf16.msra.mxu0 %v226
      %244 = vmatpush.bf16.msra.mxu0 %v225
      %245 = vmatpush.bf16.msra.mxu0 %v224
      %246 = vmatpush.bf16.msra.mxu0 %v223
      %247 = vmatmul.bf16.gmra.mxu0 %v187
      %v248 = vpop.f32.mrf.mxu0
      %v249 = vadd.f32 0.0, %v248
      %v250 = vpop.f32.mrf.mxu0
      %v251 = vadd.f32 0.0, %v250
      %252 = vmatmul.bf16.gmra.mxu0 %v188
      %v253 = vpop.f32.mrf.mxu0
      %v254 = vadd.f32 0.0, %v253
      %v255 = vpop.f32.mrf.mxu0
      %256 = vdwg.mxu0
      %v258 = vunpack.c.l.b16 %v144
      %v259 = vpack.c.b16 %v184, %v258
      %v260 = vpack.c.b16 %v186, %v185
      %vm261 = vsmask.f32 4352
      %v263 = vshrl.u32 %v259, 16
      %v265 = vrot.slane %v263, 3
      %v266 = vshll.u32 %v259, 16
      %v268 = vrot.slane %v266, 4
      %v269 = vor.u32 %v265, %v268
      %v271 = vshrl.u32 %v260, 16
      %v273 = vrot.slane %v271, 3
      %v274 = vshll.u32 %v260, 16
      %v276 = vrot.slane %v274, 4
      %v277 = vor.u32 %v273, %v276
      %v278 = vsel %vm261, %v269, %v277
      %v297 = vunpack.c.l.b16 %v148
      %v298 = vunpack.c.l.b16 %v149
      %v299 = vunpack.c.l.b16 %v150
      %v300 = vunpack.c.l.b16 %v151
      %v301 = vunpack.c.l.b16 %v152
      %v302 = vunpack.c.l.b16 %v153
      %v303 = vunpack.c.l.b16 %v154
      %v304 = vunpack.c.l.b16 %v155
      %v305 = vunpack.c.l.b16 %v156
      %v306 = vunpack.c.l.b16 %v157
      %v307 = vunpack.c.l.b16 %v158
      %v308 = vunpack.c.l.b16 %v159
      %v309 = vunpack.c.l.b16 %v160
      %v310 = vunpack.c.l.b16 %v161
      %v311 = vunpack.c.l.b16 %v162
      %v312 = vunpack.c.l.b16 %v163
      %v313 = vpack.c.b16 %v298, %v297
      %v314 = vpack.c.b16 %v300, %v299
      %v315 = vpack.c.b16 %v302, %v301
      %v316 = vpack.c.b16 %v304, %v303
      %v317 = vpack.c.b16 %v306, %v305
      %v318 = vpack.c.b16 %v308, %v307
      %v319 = vpack.c.b16 %v310, %v309
      %v320 = vpack.c.b16 %v312, %v311
      %329 = vmatpush.bf16.msra.mxu0 %v320
      %330 = vmatpush.bf16.msra.mxu0 %v319
      %331 = vmatpush.bf16.msra.mxu0 %v318
      %332 = vmatpush.bf16.msra.mxu0 %v317
      %333 = vmatpush.bf16.msra.mxu0 %v316
      %334 = vmatpush.bf16.msra.mxu0 %v315
      %335 = vmatpush.bf16.msra.mxu0 %v314
      %336 = vmatpush.bf16.msra.mxu0 %v313
      %337 = vmatmul.bf16.gmra.mxu0 %v278
      %v338 = vpop.f32.mrf.mxu0
      %v339 = vadd.f32 %v249, %v338
      %v340 = vpop.f32.mrf.mxu0
      %v341 = vadd.f32 %v251, %v340
      %342 = vmatmul.bf16.gmra.mxu0 %v277
      %v343 = vpop.f32.mrf.mxu0
      %v344 = vadd.f32 %v254, %v343
      %v345 = vpop.f32.mrf.mxu0
      %346 = vdwg.mxu0
      %v347 = vld [vmem:[%s138 + $0x4] sm:$0xc]
      %v348 = vld [vmem:[%s138 + $0x8] sm:$0xf]
      %v349 = vld [vmem:[%s138 + $0xc] sm:$0xf]
      %v350 = vld [vmem:[%s138 + $0x10] sm:$0x7]
      %s351 = scalar_lea.vmem %s1, 128
      %v352 = vld [vmem:[%s351] sm:$0xf]
      %v353 = vld [vmem:[%s351 + $0x4] sm:$0xf]
      %v354 = vld [vmem:[%s351 + $0x8] sm:$0xf]
      %v355 = vld [vmem:[%s351 + $0xc] sm:$0xf]
      %v356 = vld [vmem:[%s351 + $0x10] sm:$0xf]
      %v357 = vld [vmem:[%s351 + $0x14] sm:$0xf]
      %v358 = vld [vmem:[%s351 + $0x18] sm:$0xf]
      %v359 = vld [vmem:[%s351 + $0x1c] sm:$0xf]
      %v360 = vld [vmem:[%s351 + $0x20] sm:$0xf]
      %v361 = vld [vmem:[%s351 + $0x24] sm:$0xf]
      %v362 = vld [vmem:[%s351 + $0x28] sm:$0xf]
      %v363 = vld [vmem:[%s351 + $0x2c] sm:$0xf]
      %v364 = vld [vmem:[%s351 + $0x30] sm:$0xf]
      %v365 = vld [vmem:[%s351 + $0x34] sm:$0xf]
      %v366 = vld [vmem:[%s351 + $0x38] sm:$0xf]
      %v367 = vld [vmem:[%s351 + $0x3c] sm:$0xf]
      %v372 = vunpack.c.l.b16 %v347
      %v373 = vunpack.c.l.b16 %v348
      %v374 = vunpack.c.l.b16 %v349
      %v375 = vunpack.c.l.b16 %v350
      %v376 = vpack.c.b16 %v373, %v372
      %v377 = vpack.c.b16 %v375, %v374
      %vm378 = vsmask.f32 5376
      %v380 = vshrl.u32 %v376, 16
      %v382 = vrot.slane %v380, 2
      %v383 = vshll.u32 %v376, 16
      %v385 = vrot.slane %v383, 3
      %v386 = vor.u32 %v382, %v385
      %v388 = vshrl.u32 %v377, 16
      %v390 = vrot.slane %v388, 2
      %v391 = vshll.u32 %v377, 16
      %v393 = vrot.slane %v391, 3
      %v394 = vor.u32 %v390, %v393
      %v395 = vsel %vm378, %v386, %v394
      %v414 = vunpack.c.l.b16 %v352
      %v415 = vunpack.c.l.b16 %v353
      %v416 = vunpack.c.l.b16 %v354
      %v417 = vunpack.c.l.b16 %v355
      %v418 = vunpack.c.l.b16 %v356
      %v419 = vunpack.c.l.b16 %v357
      %v420 = vunpack.c.l.b16 %v358
      %v421 = vunpack.c.l.b16 %v359
      %v422 = vunpack.c.l.b16 %v360
      %v423 = vunpack.c.l.b16 %v361
      %v424 = vunpack.c.l.b16 %v362
      %v425 = vunpack.c.l.b16 %v363
      %v426 = vunpack.c.l.b16 %v364
      %v427 = vunpack.c.l.b16 %v365
      %v428 = vunpack.c.l.b16 %v366
      %v429 = vunpack.c.l.b16 %v367
      %v430 = vpack.c.b16 %v415, %v414
      %v431 = vpack.c.b16 %v417, %v416
      %v432 = vpack.c.b16 %v419, %v418
      %v433 = vpack.c.b16 %v421, %v420
      %v434 = vpack.c.b16 %v423, %v422
      %v435 = vpack.c.b16 %v425, %v424
      %v436 = vpack.c.b16 %v427, %v426
      %v437 = vpack.c.b16 %v429, %v428
      %446 = vmatpush.bf16.msra.mxu0 %v437
      %447 = vmatpush.bf16.msra.mxu0 %v436
      %448 = vmatpush.bf16.msra.mxu0 %v435
      %449 = vmatpush.bf16.msra.mxu0 %v434
      %450 = vmatpush.bf16.msra.mxu0 %v433
      %451 = vmatpush.bf16.msra.mxu0 %v432
      %452 = vmatpush.bf16.msra.mxu0 %v431
      %453 = vmatpush.bf16.msra.mxu0 %v430
      %454 = vmatmul.bf16.gmra.mxu0 %v395
      %v455 = vpop.f32.mrf.mxu0
      %v456 = vadd.f32 0.0, %v455
      %v457 = vpop.f32.mrf.mxu0
      %v458 = vadd.f32 0.0, %v457
      %459 = vmatmul.bf16.gmra.mxu0 %v394
      %v460 = vpop.f32.mrf.mxu0
      %v461 = vadd.f32 0.0, %v460
      %v462 = vpop.f32.mrf.mxu0
      %463 = vdwg.mxu0
      %v464 = vadd.f32 %v339, %v456
      %v465 = vadd.f32 %v341, %v458
      %v466 = vadd.f32 %v344, %v461
      %v467 = vld [vmem:[%s138 + $0x4] sm:$0x8]
      %s468 = scalar_lea.vmem %s1, 192
      %v469 = vld [vmem:[%s468] sm:$0xf]
      %v470 = vld [vmem:[%s468 + $0x4] sm:$0xf]
      %v471 = vld [vmem:[%s468 + $0x8] sm:$0xf]
      %v472 = vld [vmem:[%s468 + $0xc] sm:$0xf]
      %v473 = vld [vmem:[%s468 + $0x10] sm:$0xf]
      %v474 = vld [vmem:[%s468 + $0x14] sm:$0xf]
      %v475 = vld [vmem:[%s468 + $0x18] sm:$0xf]
      %v476 = vld [vmem:[%s468 + $0x1c] sm:$0xf]
      %v477 = vld [vmem:[%s468 + $0x20] sm:$0xf]
      %v478 = vld [vmem:[%s468 + $0x24] sm:$0xf]
      %v479 = vld [vmem:[%s468 + $0x28] sm:$0xf]
      %v480 = vld [vmem:[%s468 + $0x2c] sm:$0xf]
      %v481 = vld [vmem:[%s468 + $0x30] sm:$0xf]
      %v482 = vld [vmem:[%s468 + $0x34] sm:$0xf]
      %v483 = vld [vmem:[%s468 + $0x38] sm:$0xf]
      %v484 = vld [vmem:[%s468 + $0x3c] sm:$0xf]
      %v486 = vunpack.c.l.b16 %v467
      %v487 = vpack.c.b16 %v373, %v486
      %vm488 = vcmask 1044480
      %v489 = vrot.slane %v487, 3
      %v490 = vrot.slane %v377, 3
      %v491 = vsel %vm488, %v489, %v490
      %v510 = vunpack.c.l.b16 %v469
      %v511 = vunpack.c.l.b16 %v470
      %v512 = vunpack.c.l.b16 %v471
      %v513 = vunpack.c.l.b16 %v472
      %v514 = vunpack.c.l.b16 %v473
      %v515 = vunpack.c.l.b16 %v474
      %v516 = vunpack.c.l.b16 %v475
      %v517 = vunpack.c.l.b16 %v476
      %v518 = vunpack.c.l.b16 %v477
      %v519 = vunpack.c.l.b16 %v478
      %v520 = vunpack.c.l.b16 %v479
      %v521 = vunpack.c.l.b16 %v480
      %v522 = vunpack.c.l.b16 %v481
      %v523 = vunpack.c.l.b16 %v482
      %v524 = vunpack.c.l.b16 %v483
      %v525 = vunpack.c.l.b16 %v484
      %v526 = vpack.c.b16 %v511, %v510
      %v527 = vpack.c.b16 %v513, %v512
      %v528 = vpack.c.b16 %v515, %v514
      %v529 = vpack.c.b16 %v517, %v516
      %v530 = vpack.c.b16 %v519, %v518
      %v531 = vpack.c.b16 %v521, %v520
      %v532 = vpack.c.b16 %v523, %v522
      %v533 = vpack.c.b16 %v525, %v524
      %542 = vmatpush.bf16.msra.mxu0 %v533
      %543 = vmatpush.bf16.msra.mxu0 %v532
      %544 = vmatpush.bf16.msra.mxu0 %v531
      %545 = vmatpush.bf16.msra.mxu0 %v530
      %546 = vmatpush.bf16.msra.mxu0 %v529
      %547 = vmatpush.bf16.msra.mxu0 %v528
      %548 = vmatpush.bf16.msra.mxu0 %v527
      %549 = vmatpush.bf16.msra.mxu0 %v526
      %550 = vmatmul.bf16.gmra.mxu0 %v491
      %v551 = vpop.f32.mrf.mxu0
      %v552 = vadd.f32 0.0, %v551
      %v553 = vpop.f32.mrf.mxu0
      %v554 = vadd.f32 0.0, %v553
      %555 = vmatmul.bf16.gmra.mxu0 %v490
      %v556 = vpop.f32.mrf.mxu0
      %v557 = vadd.f32 0.0, %v556
      %v558 = vpop.f32.mrf.mxu0
      %559 = vdwg.mxu0
      %v560 = vadd.f32 %v464, %v552
      %v561 = vadd.f32 %v465, %v554
      %v562 = vadd.f32 %v466, %v557
      %v563 = vpack.c.bf16 %v560, %v560
      %v564 = vpack.c.bf16 %v561, %v561
      %v565 = vpack.c.bf16 %v562, %v562
      %566 = vst [vmem:[%s143] sm:$0xf] %v563
      %567 = vst [vmem:[%s143 + $0x4] sm:$0xf] %v564
      %568 = vst [vmem:[%s143 + $0x8] sm:$0xf] %v565
      %p569 = scmp.lt.s32.totalorder %s13, 1
      %s570 = scalar_select %p569, %s13, 1
      %s571 = smul.addr %s570, 3
      %s572 = smul.addr %s571, 4
      %s573 = scalar_lea.vmem %s2, %s572
      // Predicated region
      $region29: #{_conv_t_s2_pallas_test.7} parent=27 // pred_check
        %p574 = pneg %p78
      $region30: #{_conv_t_s2_pallas_test.7} parent=27 // pred_check_branch
        %576 = sbr.rel (%p574) target = $region32
      $region31: #{_conv_t_s2_pallas_test.7} parent=27 // pred_region
        _
      $region32: #{_conv_t_s2_pallas_test.7} parent=27 // pred_fallthru
        _
    $region28: #{_conv_t_s2_pallas_test.7} parent=5 // pred_fallthru
      _
    %p577 = scmp.le.s32.totalorder 2, %s8
    // Predicated region
    $region33: #{_conv_t_s2_pallas_test.7} parent=5 // pred_check
      %p578 = pneg %p577
    $region34: #{_conv_t_s2_pallas_test.7} parent=5 // pred_check_branch
      %580 = sbr.rel (%p578) target = $region36
    $region35: #{_conv_t_s2_pallas_test.7} parent=5 // pred_region
      %s581 = ssub.s32 %s8, 2
      // Predicated region
      $region37: #{_conv_t_s2_pallas_test.7} parent=35 // pred_check
        %p582 = pneg %p84
      $region38: #{_conv_t_s2_pallas_test.7} parent=35 // pred_check_branch
        %584 = sbr.rel (%p582) target = $region40
      $region39: #{_conv_t_s2_pallas_test.7} parent=35 // pred_region
        %p585 = scmp.lt.s32.totalorder %s14, 1
        %s586 = scalar_select %p585, %s14, 1
        %s587 = smul.addr %s586, 3
        %s588 = smul.addr %s587, 4
        %s589 = scalar_lea.vmem %s2, %s588
      $region40: #{_conv_t_s2_pallas_test.7} parent=35 // pred_fallthru
        _
    $region36: #{_conv_t_s2_pallas_test.7} parent=5 // pred_fallthru
      _
  $region6: #{_conv_t_s2_pallas_test.7} parent=0 // loop_footer
    %s12 = sadd.s32 1, %s8
  $region7: #{_conv_t_s2_pallas_test.7} parent=0 // loop_footer_branch
    %7 = sbr.rel target = $region3
  $region8: #{_conv_t_s2_pallas_test.7} parent=0 // loop_exit
    _

// kernel: _conv_t_s2_pallas_test.5
$region0: #{_conv_t_s2_pallas_test.5}
  #allocation0 [shape = 'u32[]', space=smem, size = 0x4, offset = 0x4, fixed_abs, tag = 'smem constant byte address 0x4 - core index']
  #allocation1 [shape = 'u32[72,128]{1,0:T(1,128)}', space=vmem, size = 0x9000, scoped, tag = 'internal scratch']
  %s0 = inlined_call_operand.vmem [shape: bf16[2,40,128], index: 0, kind: input, shape index: {}]
  %s1 = inlined_call_operand.vmem [shape: bf16[4,128,128], index: 1, kind: input, shape index: {}]
  %s2 = inlined_call_operand.vmem [shape: bf16[2,24,128], index: 2, kind: output, shape index: {}]
  %s3 = sld [smem:[#allocation0]]
  $region41: #{_conv_t_s2_pallas_test.5} parent=0
    _
  %s5 = ssub.s32 1, %s3
  %s6 = scalar_select 0, %s5, %s3
  loop: start=0, step=1, limit=4
  $region2: #{_conv_t_s2_pallas_test.5} parent=0 // loop_pre_header
    _
  $region3: #{_conv_t_s2_pallas_test.5} parent=0 // loop_header
    %s8 = sphi 0, %s12
    %p9 = scmp.ge.s32.totalorder %s8, 4
    %s18 = sphi 0, %s20
    %s21 = sphi 0, %s18
    %s22 = sphi 0, %s21
    %s38 = sphi 0, %s22
    %s42 = sphi 0, %s42
    %s44 = sphi 0, %s42
    %s45 = sphi 0, %s44
    %s59 = sphi 0, %s45
    %s65 = sphi 0, %s67
    %s68 = sphi 0, %s65
    %s69 = sphi 0, %s68
    %s85 = sphi 0, %s69
  $region4: #{_conv_t_s2_pallas_test.5} parent=0 // loop_header_branch
    %11 = sbr.rel (%p9) target = $region8
  $region5: #{_conv_t_s2_pallas_test.5} parent=0 // loop_body
    %s13 = ssub.s32 %s8, 1
    %s14 = ssub.s32 %s8, 2
    %s15 = sadd.s32 %s8, 1
    %s16 = ssub.s32 %s8, %s15
    %p17 = scmp.eq.s32.totalorder %s16, 0
    %s19 = sadd.s32 %s18, 1
    %s20 = scalar_select %p17, %s18, %s19
    %p23 = pneg %p17
    %p24 = scmp.eq.s32.totalorder %s8, 1
    %p25 = por %p23, %p24
    %p26 = scmp.ne.s32.totalorder %s18, %s21
    %p27 = scmp.eq.s32.totalorder %s8, 0
    %p28 = por %p26, %p27
    %p29 = scmp.ne.s32.totalorder %s18, %s21
    %p30 = scmp.eq.s32.totalorder %s13, 1
    %p31 = por %p29, %p30
    %p32 = scmp.ne.s32.totalorder %s21, %s22
    %p33 = scmp.eq.s32.totalorder %s13, 0
    %p34 = por %p32, %p33
    %p35 = scmp.ne.s32.totalorder %s21, %s22
    %p36 = scmp.eq.s32.totalorder %s14, 1
    %p37 = por %p35, %p36
    %p39 = scmp.ne.s32.totalorder %s22, %s38
    %p40 = scmp.eq.s32.totalorder %s14, 0
    %p41 = por %p39, %p40
    %s43 = sadd.s32 %s42, 1
    %p46 = scmp.eq.s32.totalorder %s8, 1
    %p47 = scmp.ne.s32.totalorder %s42, %s44
    %p48 = scmp.eq.s32.totalorder %s8, 0
    %p49 = por %p47, %p48
    %p50 = scmp.ne.s32.totalorder %s42, %s44
    %p51 = scmp.eq.s32.totalorder %s13, 1
    %p52 = por %p50, %p51
    %p53 = scmp.ne.s32.totalorder %s44, %s45
    %p54 = scmp.eq.s32.totalorder %s13, 0
    %p55 = por %p53, %p54
    %p56 = scmp.ne.s32.totalorder %s44, %s45
    %p57 = scmp.eq.s32.totalorder %s14, 1
    %p58 = por %p56, %p57
    %p60 = scmp.ne.s32.totalorder %s45, %s59
    %p61 = scmp.eq.s32.totalorder %s14, 0
    %p62 = por %p60, %p61
    %s63 = ssub.s32 %s8, %s15
    %p64 = scmp.eq.s32.totalorder %s63, 0
    %s66 = sadd.s32 %s65, 1
    %s67 = scalar_select %p64, %s65, %s66
    %p70 = pneg %p64
    %p71 = scmp.eq.s32.totalorder %s8, 1
    %p72 = por %p70, %p71
    %p73 = scmp.ne.s32.totalorder %s65, %s68
    %p74 = scmp.eq.s32.totalorder %s8, 0
    %p75 = por %p73, %p74
    %p76 = scmp.ne.s32.totalorder %s65, %s68
    %p77 = scmp.eq.s32.totalorder %s13, 1
    %p78 = por %p76, %p77
    %p79 = scmp.ne.s32.totalorder %s68, %s69
    %p80 = scmp.eq.s32.totalorder %s13, 0
    %p81 = por %p79, %p80
    %p82 = scmp.ne.s32.totalorder %s68, %s69
    %p83 = scmp.eq.s32.totalorder %s14, 1
    %p84 = por %p82, %p83
    %p86 = scmp.ne.s32.totalorder %s69, %s85
    %p87 = scmp.eq.s32.totalorder %s14, 0
    %p88 = por %p86, %p87
    %p89 = scmp.le.s32.totalorder 1, %s8
    %p90 = scmp.lt.s32.totalorder %s8, 3
    %p91 = pnand %p89, %p90
    %p92 = pneg %p91
    // Predicated region
    $region9: #{_conv_t_s2_pallas_test.5} parent=5 // pred_check
      _
    $region10: #{_conv_t_s2_pallas_test.5} parent=5 // pred_check_branch
      %94 = sbr.rel (%p91) target = $region12
    $region11: #{_conv_t_s2_pallas_test.5} parent=5 // pred_region
      %s95 = ssub.s32 %s8, 1
      // Predicated region
      $region13: #{_conv_t_s2_pallas_test.5} parent=11 // pred_check
        %p96 = pneg %p55
      $region14: #{_conv_t_s2_pallas_test.5} parent=11 // pred_check_branch
        %98 = sbr.rel (%p96) target = $region16
      $region15: #{_conv_t_s2_pallas_test.5} parent=11 // pred_region
        _
      $region16: #{_conv_t_s2_pallas_test.5} parent=11 // pred_fallthru
        _
    $region12: #{_conv_t_s2_pallas_test.5} parent=5 // pred_fallthru
      _
    %p99 = scmp.lt.s32.totalorder %s8, 2
    // Predicated region
    $region17: #{_conv_t_s2_pallas_test.5} parent=5 // pred_check
      %p100 = pneg %p99
    $region18: #{_conv_t_s2_pallas_test.5} parent=5 // pred_check_branch
      %102 = sbr.rel (%p100) target = $region20
    $region19: #{_conv_t_s2_pallas_test.5} parent=5 // pred_region
      // Predicated region
      $region21: #{_conv_t_s2_pallas_test.5} parent=19 // pred_check
        %p103 = pneg %p28
      $region22: #{_conv_t_s2_pallas_test.5} parent=19 // pred_check_branch
        %105 = sbr.rel (%p103) target = $region24
      $region23: #{_conv_t_s2_pallas_test.5} parent=19 // pred_region
        %p106 = scmp.lt.s32.totalorder %s8, 1
        %s107 = scalar_select %p106, %s8, 1
        %s108 = smul.addr %s107, 5
        %s109 = smul.addr %s108, 4
        %s110 = scalar_lea.vmem %s0, %s109
      $region24: #{_conv_t_s2_pallas_test.5} parent=19 // pred_fallthru
        _
    $region20: #{_conv_t_s2_pallas_test.5} parent=5 // pred_fallthru
      _
    %p111 = scmp.le.s32.totalorder 1, %s8
    %p112 = scmp.lt.s32.totalorder %s8, 3
    %p113 = pnand %p111, %p112
    %p114 = pneg %p113
    // Predicated region
    $region25: #{_conv_t_s2_pallas_test.5} parent=5 // pred_check
      _
    $region26: #{_conv_t_s2_pallas_test.5} parent=5 // pred_check_branch
      %116 = sbr.rel (%p113) target = $region28
    $region27: #{_conv_t_s2_pallas_test.5} parent=5 // pred_region
      %s117 = ssub.s32 %s8, 1
      %p118 = scmp.lt.s32.totalorder %s13, 1
      %s119 = scalar_select %p118, %s13, 1
      %s120 = smul.addr %s119, 5
      %s121 = smul.addr %s120, 4
      %s122 = scalar_lea.vmem %s0, %s121
      %p123 = pneg %p34
      %p124 = pneg %p31
      %p125 = pneg %p55
      %p126 = pneg %p52
      %p127 = pneg %p81
      %p128 = pneg %p78
      %p129 = scmp.lt.s32.totalorder %s13, 1
      %s130 = scalar_select %p129, %s13, 1
      %s131 = smul.addr %s130, 3
      %s132 = smul.addr %s131, 4
      %s133 = scalar_lea.vmem %s2, %s132
      %p134 = scmp.lt.s32.totalorder %s13, 1
      %s135 = scalar_select %p134, %s13, 1
      %s136 = smul.addr %s135, 5
      %s137 = smul.addr %s136, 4
      %s138 = scalar_lea.vmem %s0, %s137
      %p139 = scmp.lt.s32.totalorder %s13, 1
      %s140 = scalar_select %p139, %s13, 1
      %s141 = smul.addr %s140, 3
      %s142 = smul.addr %s141, 4
      %s143 = scalar_lea.vmem %s2, %s142
      %v144 = vld [vmem:[%s138] sm:$0xf]
      %v145 = vld [vmem:[%s138 + $0x4] sm:$0xf]
      %v146 = vld [vmem:[%s138 + $0x8] sm:$0xf]
      %v147 = vld [vmem:[%s138 + $0xc] sm:$0x1]
      %v148 = vld [vmem:[%s1] sm:$0xf]
      %v149 = vld [vmem:[%s1 + $0x4] sm:$0xf]
      %v150 = vld [vmem:[%s1 + $0x8] sm:$0xf]
      %v151 = vld [vmem:[%s1 + $0xc] sm:$0xf]
      %v152 = vld [vmem:[%s1 + $0x10] sm:$0xf]
      %v153 = vld [vmem:[%s1 + $0x14] sm:$0xf]
      %v154 = vld [vmem:[%s1 + $0x18] sm:$0xf]
      %v155 = vld [vmem:[%s1 + $0x1c] sm:$0xf]
      %v156 = vld [vmem:[%s1 + $0x20] sm:$0xf]
      %v157 = vld [vmem:[%s1 + $0x24] sm:$0xf]
      %v158 = vld [vmem:[%s1 + $0x28] sm:$0xf]
      %v159 = vld [vmem:[%s1 + $0x2c] sm:$0xf]
      %v160 = vld [vmem:[%s1 + $0x30] sm:$0xf]
      %v161 = vld [vmem:[%s1 + $0x34] sm:$0xf]
      %v162 = vld [vmem:[%s1 + $0x38] sm:$0xf]
      %v163 = vld [vmem:[%s1 + $0x3c] sm:$0xf]
      %v164 = vld [vmem:[%s138] sm:$0xe]
      %s165 = scalar_lea.vmem %s1, 64
      %v166 = vld [vmem:[%s165] sm:$0xf]
      %v167 = vld [vmem:[%s165 + $0x4] sm:$0xf]
      %v168 = vld [vmem:[%s165 + $0x8] sm:$0xf]
      %v169 = vld [vmem:[%s165 + $0xc] sm:$0xf]
      %v170 = vld [vmem:[%s165 + $0x10] sm:$0xf]
      %v171 = vld [vmem:[%s165 + $0x14] sm:$0xf]
      %v172 = vld [vmem:[%s165 + $0x18] sm:$0xf]
      %v173 = vld [vmem:[%s165 + $0x1c] sm:$0xf]
      %v174 = vld [vmem:[%s165 + $0x20] sm:$0xf]
      %v175 = vld [vmem:[%s165 + $0x24] sm:$0xf]
      %v176 = vld [vmem:[%s165 + $0x28] sm:$0xf]
      %v177 = vld [vmem:[%s165 + $0x2c] sm:$0xf]
      %v178 = vld [vmem:[%s165 + $0x30] sm:$0xf]
      %v179 = vld [vmem:[%s165 + $0x34] sm:$0xf]
      %v180 = vld [vmem:[%s165 + $0x38] sm:$0xf]
      %v181 = vld [vmem:[%s165 + $0x3c] sm:$0xf]
      %v186 = vunpack.c.l.b16 %v164
      %v187 = vunpack.c.l.b16 %v145
      %v188 = vunpack.c.l.b16 %v146
      %v189 = vunpack.c.l.b16 %v147
      %v190 = vpack.c.b16 %v187, %v186
      %v191 = vpack.c.b16 %v189, %v188
      %vm192 = vcmask 1046528
      %v193 = vrot.slane %v190, 1
      %v194 = vrot.slane %v191, 1
      %v195 = vsel %vm192, %v193, %v194
      %v214 = vunpack.c.l.b16 %v166
      %v215 = vunpack.c.l.b16 %v167
      %v216 = vunpack.c.l.b16 %v168
      %v217 = vunpack.c.l.b16 %v169
      %v218 = vunpack.c.l.b16 %v170
      %v219 = vunpack.c.l.b16 %v171
      %v220 = vunpack.c.l.b16 %v172
      %v221 = vunpack.c.l.b16 %v173
      %v222 = vunpack.c.l.b16 %v174
      %v223 = vunpack.c.l.b16 %v175
      %v224 = vunpack.c.l.b16 %v176
      %v225 = vunpack.c.l.b16 %v177
      %v226 = vunpack.c.l.b16 %v178
      %v227 = vunpack.c.l.b16 %v179
      %v228 = vunpack.c.l.b16 %v180
      %v229 = vunpack.c.l.b16 %v181
      %v230 = vpack.c.b16 %v215, %v214
      %v231 = vpack.c.b16 %v217, %v216
      %v232 = vpack.c.b16 %v219, %v218
      %v233 = vpack.c.b16 %v221, %v220
      %v234 = vpack.c.b16 %v223, %v222
      %v235 = vpack.c.b16 %v225, %v224
      %v236 = vpack.c.b16 %v227, %v226
      %v237 = vpack.c.b16 %v229, %v228
      %246 = vmatpush.bf16.msra.mxu0 %v237
      %247 = vmatpush.bf16.msra.mxu0 %v236
      %248 = vmatpush.bf16.msra.mxu0 %v235
      %249 = vmatpush.bf16.msra.mxu0 %v234
      %250 = vmatpush.bf16.msra.mxu0 %v233
      %251 = vmatpush.bf16.msra.mxu0 %v232
      %252 = vmatpush.bf16.msra.mxu0 %v231
      %253 = vmatpush.bf16.msra.mxu0 %v230
      %254 = vmatmul.bf16.gmra.mxu0 %v195
      %v255 = vpop.f32.mrf.mxu0
      %v256 = vadd.f32 0.0, %v255
      %v257 = vpop.f32.mrf.mxu0
      %v258 = vadd.f32 0.0, %v257
      %259 = vmatmul.bf16.gmra.mxu0 %v194
      %v260 = vpop.f32.mrf.mxu0
      %v261 = vadd.f32 0.0, %v260
      %v262 = vpop.f32.mrf.mxu0
      %263 = vdwg.mxu0
      %v265 = vunpack.c.l.b16 %v144
      %v266 = vpack.c.b16 %v187, %v265
      %vm267 = vsmask.f32 7424
      %v269 = vshrl.u32 %v266, 16
      %v271 = vshll.u32 %v266, 16
      %v273 = vrot.slane %v271, 1
      %v274 = vor.u32 %v269, %v273
      %v276 = vshll.u32 %v191, 16
      %v278 = vrot.slane %v276, 1
      %v279 = vsel %vm267, %v274, %v278
      %v280 = vshrl.u32 %v191, 16
      %v282 = vor.u32 %v280, %v278
      %v301 = vunpack.c.l.b16 %v148
      %v302 = vunpack.c.l.b16 %v149
      %v303 = vunpack.c.l.b16 %v150
      %v304 = vunpack.c.l.b16 %v151
      %v305 = vunpack.c.l.b16 %v152
      %v306 = vunpack.c.l.b16 %v153
      %v307 = vunpack.c.l.b16 %v154
      %v308 = vunpack.c.l.b16 %v155
      %v309 = vunpack.c.l.b16 %v156
      %v310 = vunpack.c.l.b16 %v157
      %v311 = vunpack.c.l.b16 %v158
      %v312 = vunpack.c.l.b16 %v159
      %v313 = vunpack.c.l.b16 %v160
      %v314 = vunpack.c.l.b16 %v161
      %v315 = vunpack.c.l.b16 %v162
      %v316 = vunpack.c.l.b16 %v163
      %v317 = vpack.c.b16 %v302, %v301
      %v318 = vpack.c.b16 %v304, %v303
      %v319 = vpack.c.b16 %v306, %v305
      %v320 = vpack.c.b16 %v308, %v307
      %v321 = vpack.c.b16 %v310, %v309
      %v322 = vpack.c.b16 %v312, %v311
      %v323 = vpack.c.b16 %v314, %v313
      %v324 = vpack.c.b16 %v316, %v315
      %333 = vmatpush.bf16.msra.mxu0 %v324
      %334 = vmatpush.bf16.msra.mxu0 %v323
      %335 = vmatpush.bf16.msra.mxu0 %v322
      %336 = vmatpush.bf16.msra.mxu0 %v321
      %337 = vmatpush.bf16.msra.mxu0 %v320
      %338 = vmatpush.bf16.msra.mxu0 %v319
      %339 = vmatpush.bf16.msra.mxu0 %v318
      %340 = vmatpush.bf16.msra.mxu0 %v317
      %341 = vmatmul.bf16.gmra.mxu0 %v279
      %v342 = vpop.f32.mrf.mxu0
      %v343 = vadd.f32 %v256, %v342
      %v344 = vpop.f32.mrf.mxu0
      %v345 = vadd.f32 %v258, %v344
      %346 = vmatmul.bf16.gmra.mxu0 %v282
      %v347 = vpop.f32.mrf.mxu0
      %v348 = vadd.f32 %v261, %v347
      %v349 = vpop.f32.mrf.mxu0
      %350 = vdwg.mxu0
      %v351 = vld [vmem:[%s138] sm:$0x8]
      %v352 = vld [vmem:[%s138 + $0xc] sm:$0xf]
      %s353 = scalar_lea.vmem %s1, 128
      %v354 = vld [vmem:[%s353] sm:$0xf]
      %v355 = vld [vmem:[%s353 + $0x4] sm:$0xf]
      %v356 = vld [vmem:[%s353 + $0x8] sm:$0xf]
      %v357 = vld [vmem:[%s353 + $0xc] sm:$0xf]
      %v358 = vld [vmem:[%s353 + $0x10] sm:$0xf]
      %v359 = vld [vmem:[%s353 + $0x14] sm:$0xf]
      %v360 = vld [vmem:[%s353 + $0x18] sm:$0xf]
      %v361 = vld [vmem:[%s353 + $0x1c] sm:$0xf]
      %v362 = vld [vmem:[%s353 + $0x20] sm:$0xf]
      %v363 = vld [vmem:[%s353 + $0x24] sm:$0xf]
      %v364 = vld [vmem:[%s353 + $0x28] sm:$0xf]
      %v365 = vld [vmem:[%s353 + $0x2c] sm:$0xf]
      %v366 = vld [vmem:[%s353 + $0x30] sm:$0xf]
      %v367 = vld [vmem:[%s353 + $0x34] sm:$0xf]
      %v368 = vld [vmem:[%s353 + $0x38] sm:$0xf]
      %v369 = vld [vmem:[%s353 + $0x3c] sm:$0xf]
      %v372 = vunpack.c.l.b16 %v351
      %v373 = vunpack.c.l.b16 %v352
      %v374 = vpack.c.b16 %v187, %v372
      %v375 = vpack.c.b16 %v373, %v188
      %vm376 = vsmask.f32 4352
      %v378 = vshrl.u32 %v374, 16
      %v380 = vrot.slane %v378, 3
      %v381 = vshll.u32 %v374, 16
      %v383 = vrot.slane %v381, 4
      %v384 = vor.u32 %v380, %v383
      %v386 = vshrl.u32 %v375, 16
      %v388 = vrot.slane %v386, 3
      %v389 = vshll.u32 %v375, 16
      %v391 = vrot.slane %v389, 4
      %v392 = vor.u32 %v388, %v391
      %v393 = vsel %vm376, %v384, %v392
      %v412 = vunpack.c.l.b16 %v354
      %v413 = vunpack.c.l.b16 %v355
      %v414 = vunpack.c.l.b16 %v356
      %v415 = vunpack.c.l.b16 %v357
      %v416 = vunpack.c.l.b16 %v358
      %v417 = vunpack.c.l.b16 %v359
      %v418 = vunpack.c.l.b16 %v360
      %v419 = vunpack.c.l.b16 %v361
      %v420 = vunpack.c.l.b16 %v362
      %v421 = vunpack.c.l.b16 %v363
      %v422 = vunpack.c.l.b16 %v364
      %v423 = vunpack.c.l.b16 %v365
      %v424 = vunpack.c.l.b16 %v366
      %v425 = vunpack.c.l.b16 %v367
      %v426 = vunpack.c.l.b16 %v368
      %v427 = vunpack.c.l.b16 %v369
      %v428 = vpack.c.b16 %v413, %v412
      %v429 = vpack.c.b16 %v415, %v414
      %v430 = vpack.c.b16 %v417, %v416
      %v431 = vpack.c.b16 %v419, %v418
      %v432 = vpack.c.b16 %v421, %v420
      %v433 = vpack.c.b16 %v423, %v422
      %v434 = vpack.c.b16 %v425, %v424
      %v435 = vpack.c.b16 %v427, %v426
      %444 = vmatpush.bf16.msra.mxu0 %v435
      %445 = vmatpush.bf16.msra.mxu0 %v434
      %446 = vmatpush.bf16.msra.mxu0 %v433
      %447 = vmatpush.bf16.msra.mxu0 %v432
      %448 = vmatpush.bf16.msra.mxu0 %v431
      %449 = vmatpush.bf16.msra.mxu0 %v430
      %450 = vmatpush.bf16.msra.mxu0 %v429
      %451 = vmatpush.bf16.msra.mxu0 %v428
      %452 = vmatmul.bf16.gmra.mxu0 %v393
      %v453 = vpop.f32.mrf.mxu0
      %v454 = vadd.f32 0.0, %v453
      %v455 = vpop.f32.mrf.mxu0
      %v456 = vadd.f32 0.0, %v455
      %457 = vmatmul.bf16.gmra.mxu0 %v392
      %v458 = vpop.f32.mrf.mxu0
      %v459 = vadd.f32 0.0, %v458
      %v460 = vpop.f32.mrf.mxu0
      %461 = vdwg.mxu0
      %v462 = vadd.f32 %v343, %v454
      %v463 = vadd.f32 %v345, %v456
      %v464 = vadd.f32 %v348, %v459
      %s465 = scalar_lea.vmem %s1, 192
      %v466 = vld [vmem:[%s465] sm:$0xf]
      %v467 = vld [vmem:[%s465 + $0x4] sm:$0xf]
      %v468 = vld [vmem:[%s465 + $0x8] sm:$0xf]
      %v469 = vld [vmem:[%s465 + $0xc] sm:$0xf]
      %v470 = vld [vmem:[%s465 + $0x10] sm:$0xf]
      %v471 = vld [vmem:[%s465 + $0x14] sm:$0xf]
      %v472 = vld [vmem:[%s465 + $0x18] sm:$0xf]
      %v473 = vld [vmem:[%s465 + $0x1c] sm:$0xf]
      %v474 = vld [vmem:[%s465 + $0x20] sm:$0xf]
      %v475 = vld [vmem:[%s465 + $0x24] sm:$0xf]
      %v476 = vld [vmem:[%s465 + $0x28] sm:$0xf]
      %v477 = vld [vmem:[%s465 + $0x2c] sm:$0xf]
      %v478 = vld [vmem:[%s465 + $0x30] sm:$0xf]
      %v479 = vld [vmem:[%s465 + $0x34] sm:$0xf]
      %v480 = vld [vmem:[%s465 + $0x38] sm:$0xf]
      %v481 = vld [vmem:[%s465 + $0x3c] sm:$0xf]
      %v482 = vpack.c.b16 %v188, %v187
      %v483 = vpack.c.b16 %v373, %v373
      %v502 = vunpack.c.l.b16 %v466
      %v503 = vunpack.c.l.b16 %v467
      %v504 = vunpack.c.l.b16 %v468
      %v505 = vunpack.c.l.b16 %v469
      %v506 = vunpack.c.l.b16 %v470
      %v507 = vunpack.c.l.b16 %v471
      %v508 = vunpack.c.l.b16 %v472
      %v509 = vunpack.c.l.b16 %v473
      %v510 = vunpack.c.l.b16 %v474
      %v511 = vunpack.c.l.b16 %v475
      %v512 = vunpack.c.l.b16 %v476
      %v513 = vunpack.c.l.b16 %v477
      %v514 = vunpack.c.l.b16 %v478
      %v515 = vunpack.c.l.b16 %v479
      %v516 = vunpack.c.l.b16 %v480
      %v517 = vunpack.c.l.b16 %v481
      %v518 = vpack.c.b16 %v503, %v502
      %v519 = vpack.c.b16 %v505, %v504
      %v520 = vpack.c.b16 %v507, %v506
      %v521 = vpack.c.b16 %v509, %v508
      %v522 = vpack.c.b16 %v511, %v510
      %v523 = vpack.c.b16 %v513, %v512
      %v524 = vpack.c.b16 %v515, %v514
      %v525 = vpack.c.b16 %v517, %v516
      %534 = vmatpush.bf16.msra.mxu0 %v525
      %535 = vmatpush.bf16.msra.mxu0 %v524
      %536 = vmatpush.bf16.msra.mxu0 %v523
      %537 = vmatpush.bf16.msra.mxu0 %v522
      %538 = vmatpush.bf16.msra.mxu0 %v521
      %539 = vmatpush.bf16.msra.mxu0 %v520
      %540 = vmatpush.bf16.msra.mxu0 %v519
      %541 = vmatpush.bf16.msra.mxu0 %v518
      %542 = vmatmul.bf16.gmra.mxu0 %v482
      %v543 = vpop.f32.mrf.mxu0
      %v544 = vadd.f32 0.0, %v543
      %v545 = vpop.f32.mrf.mxu0
      %v546 = vadd.f32 0.0, %v545
      %547 = vmatmul.bf16.gmra.mxu0 %v483
      %v548 = vpop.f32.mrf.mxu0
      %v549 = vadd.f32 0.0, %v548
      %v550 = vpop.f32.mrf.mxu0
      %551 = vdwg.mxu0
      %v552 = vadd.f32 %v462, %v544
      %v553 = vadd.f32 %v463, %v546
      %v554 = vadd.f32 %v464, %v549
      %v555 = vpack.c.bf16 %v552, %v552
      %v556 = vpack.c.bf16 %v553, %v553
      %v557 = vpack.c.bf16 %v554, %v554
      %558 = vst [vmem:[%s143] sm:$0xf] %v555
      %559 = vst [vmem:[%s143 + $0x4] sm:$0xf] %v556
      %560 = vst [vmem:[%s143 + $0x8] sm:$0xf] %v557
      %p561 = scmp.lt.s32.totalorder %s13, 1
      %s562 = scalar_select %p561, %s13, 1
      %s563 = smul.addr %s562, 3
      %s564 = smul.addr %s563, 4
      %s565 = scalar_lea.vmem %s2, %s564
      // Predicated region
      $region29: #{_conv_t_s2_pallas_test.5} parent=27 // pred_check
        %p566 = pneg %p78
      $region30: #{_conv_t_s2_pallas_test.5} parent=27 // pred_check_branch
        %568 = sbr.rel (%p566) target = $region32
      $region31: #{_conv_t_s2_pallas_test.5} parent=27 // pred_region
        _
      $region32: #{_conv_t_s2_pallas_test.5} parent=27 // pred_fallthru
        _
    $region28: #{_conv_t_s2_pallas_test.5} parent=5 // pred_fallthru
      _
    %p569 = scmp.le.s32.totalorder 2, %s8
    // Predicated region
    $region33: #{_conv_t_s2_pallas_test.5} parent=5 // pred_check
      %p570 = pneg %p569
    $region34: #{_conv_t_s2_pallas_test.5} parent=5 // pred_check_branch
      %572 = sbr.rel (%p570) target = $region36
    $region35: #{_conv_t_s2_pallas_test.5} parent=5 // pred_region
      %s573 = ssub.s32 %s8, 2
      // Predicated region
      $region37: #{_conv_t_s2_pallas_test.5} parent=35 // pred_check
        %p574 = pneg %p84
      $region38: #{_conv_t_s2_pallas_test.5} parent=35 // pred_check_branch
        %576 = sbr.rel (%p574) target = $region40
      $region39: #{_conv_t_s2_pallas_test.5} parent=35 // pred_region
        %p577 = scmp.lt.s32.totalorder %s14, 1
        %s578 = scalar_select %p577, %s14, 1
        %s579 = smul.addr %s578, 3
        %s580 = smul.addr %s579, 4
        %s581 = scalar_lea.vmem %s2, %s580
      $region40: #{_conv_t_s2_pallas_test.5} parent=35 // pred_fallthru
        _
    $region36: #{_conv_t_s2_pallas_test.5} parent=5 // pred_fallthru
      _
  $region6: #{_conv_t_s2_pallas_test.5} parent=0 // loop_footer
    %s12 = sadd.s32 1, %s8
  $region7: #{_conv_t_s2_pallas_test.5} parent=0 // loop_footer_branch
    %7 = sbr.rel target = $region3
  $region8: #{_conv_t_s2_pallas_test.5} parent=0 // loop_exit
    _

</llo_original>
